<compile_context>
chip_gen: v5e
topology: v5e:2x2
jax: 0.10.0
libtpu: 0.0.40
codegen_flags: <defaults>
</compile_context>

<pallas_src>
import jax
import jax.numpy as jnp
from jax.experimental import pallas as pl
from jax.experimental.pallas import tpu as pltpu

INPUT_SIZE = 3 * 64 * 64   # 12288
HIDDEN = 30
OUT = 6

# K-reduction tile. 12288 => whole reduction in a single grid step. With the
# lane-dense (HIDDEN, TK) W1 layout this is ~1.6 MiB/buffer of VMEM, far under
# the default scoped limit on every generation (incl. v5e's 16 MiB).
TK = 12288

# Optional: stream W1 as bf16 (f32 accumulation). Kept off for f32 parity with
# the PyTorch reference.
USE_BF16_W1 = False


def mlp_kernel(x_ref, w1t_ref, b1_ref, w2_ref, b2_ref, o_ref, acc_ref):
    """x_ref: (B, TK); w1t_ref: (HIDDEN, TK); b1_ref: (1, HIDDEN);
    w2_ref: (HIDDEN, OUT); b2_ref: (1, OUT); o_ref: (B, OUT);
    acc_ref: (B, HIDDEN) f32 scratch (hidden pre-activation accumulator)."""
    k = pl.program_id(0)

    # init hidden accumulator on first K-tile
    @pl.when(k == 0)
    def _():
        acc_ref[...] = jnp.zeros_like(acc_ref)

    x_tile = x_ref[...]
    w1t_tile = w1t_ref[...]                       # (HIDDEN, TK), lane-dense
    if w1t_tile.dtype == jnp.bfloat16:
        x_tile = x_tile.astype(jnp.bfloat16)

    # (B, TK) . (HIDDEN, TK) contracted on the last dims -> (B, HIDDEN)
    acc_ref[...] += jax.lax.dot_general(
        x_tile, w1t_tile,
        dimension_numbers=(((1,), (1,)), ((), ())),
        preferred_element_type=jnp.float32,
    )

    # last K-tile: bias + ReLU + second layer + bias
    @pl.when(k == pl.num_programs(0) - 1)
    def _():
        h = jnp.maximum(acc_ref[...] + b1_ref[...], 0.0)          # (B, HIDDEN)
        out = jnp.dot(h, w2_ref[...], preferred_element_type=jnp.float32)
        o_ref[...] = (out + b2_ref[...]).astype(o_ref.dtype)


@jax.jit
def mlp_forward(x_nchw, w1t, b1, w2, b2):
    """x_nchw: (B, 3, 64, 64) f32; w1t: (HIDDEN, INPUT_SIZE) (PyTorch layout);
    b1: (HIDDEN,); w2: (HIDDEN, OUT); b2: (OUT,). Returns (B, OUT) f32."""
    B = x_nchw.shape[0]
    x = x_nchw.reshape(B, -1).astype(jnp.float32)                 # (B, 12288)

    b1_2d = b1.reshape(1, HIDDEN).astype(jnp.float32)
    b2_2d = b2.reshape(1, OUT).astype(jnp.float32)

    n_k = INPUT_SIZE // TK                                        # 1

    out = pl.pallas_call(
        mlp_kernel,
        out_shape=jax.ShapeDtypeStruct((B, OUT), jnp.float32),
        grid_spec=pltpu.PrefetchScalarGridSpec(
            num_scalar_prefetch=0,
            grid=(n_k,),
            in_specs=[
                pl.BlockSpec((B, TK), lambda k: (0, k)),          # x tile (full batch)
                pl.BlockSpec((HIDDEN, TK), lambda k: (0, k)),     # W1^T tile (lane-dense)
                pl.BlockSpec((1, HIDDEN), lambda k: (0, 0)),      # b1 (resident)
                pl.BlockSpec((HIDDEN, OUT), lambda k: (0, 0)),    # w2 (resident)
                pl.BlockSpec((1, OUT), lambda k: (0, 0)),         # b2 (resident)
            ],
            out_specs=pl.BlockSpec((B, OUT), lambda k: (0, 0)),
            scratch_shapes=[pltpu.VMEM((B, HIDDEN), jnp.float32)],
        ),
        compiler_params=pltpu.CompilerParams(
            dimension_semantics=("arbitrary",),   # K is a reduction axis
        ),
    )(x, w1t, b1_2d, w2, b2_2d)

    return out


def init_params(key):
    """Deterministic init mimicking torch.nn.Linear defaults
    (uniform +-1/sqrt(fan_in)). W1 is produced directly in PyTorch's
    (out_features, in_features) layout so no per-call transpose is needed."""
    k1, k2, k3, k4 = jax.random.split(key, 4)
    bound1 = 1.0 / jnp.sqrt(jnp.float32(INPUT_SIZE))
    bound2 = 1.0 / jnp.sqrt(jnp.float32(HIDDEN))
    w1t = jax.random.uniform(k1, (HIDDEN, INPUT_SIZE), jnp.float32, -bound1, bound1)
    b1 = jax.random.uniform(k2, (HIDDEN,), jnp.float32, -bound1, bound1)
    w2 = jax.random.uniform(k3, (HIDDEN, OUT), jnp.float32, -bound2, bound2)
    b2 = jax.random.uniform(k4, (OUT,), jnp.float32, -bound2, bound2)
    if USE_BF16_W1:
        w1t = w1t.astype(jnp.bfloat16)
    return w1t, b1, w2, b2


if __name__ == "__main__":
    key = jax.random.PRNGKey(0)
    kx, kp = jax.random.split(key)

    B = 2
    x = jax.random.normal(kx, (B, 3, 64, 64), jnp.float32)   # NCHW, like PyTorch
    w1t, b1, w2, b2 = init_params(kp)

    out = mlp_forward(x, w1t, b1, w2, b2)
    out = jax.block_until_ready(out)

    # reference check in plain JAX (same math as the PyTorch module)
    x_flat = x.reshape(B, -1)
    ref = jnp.maximum(x_flat @ w1t.astype(jnp.float32).T + b1, 0.0) @ w2 + b2
    assert out.shape == (B, OUT)
    assert jnp.allclose(out, ref, atol=1e-4, rtol=1e-4)

    print("KERNEL_OK")
</pallas_src>

<mosaic_0001>
module attributes {stable_mosaic.version = 11 : i64} {
  func.func @mlp_kernel(%arg0: i32, %arg1: memref<2x12288xf32, #tpu.memory_space<vmem>>, %arg2: memref<30x12288xf32, #tpu.memory_space<vmem>>, %arg3: memref<1x30xf32, #tpu.memory_space<vmem>>, %arg4: memref<30x6xf32, #tpu.memory_space<vmem>>, %arg5: memref<1x6xf32, #tpu.memory_space<vmem>>, %arg6: memref<2x6xf32, #tpu.memory_space<vmem>>, %arg7: memref<2x30xf32, #tpu.memory_space<vmem>>) attributes {dimension_semantics = [#tpu.dimension_semantics<arbitrary>], iteration_bounds = array<i64: 1>, scalar_prefetch = 0 : i64, scratch_operands = 1 : i64, tpu.core_type = #tpu.core_type<tc>, window_params = [{transform_indices = @transform_0, window_bounds = array<i64: 2, 12288>}, {transform_indices = @transform_1, window_bounds = array<i64: 30, 12288>}, {pipeline_mode = #tpu.pipeline_mode<synchronous>, transform_indices = @transform_2, window_bounds = array<i64: 1, 30>}, {pipeline_mode = #tpu.pipeline_mode<synchronous>, transform_indices = @transform_3, window_bounds = array<i64: 30, 6>}, {pipeline_mode = #tpu.pipeline_mode<synchronous>, transform_indices = @transform_4, window_bounds = array<i64: 1, 6>}, {pipeline_mode = #tpu.pipeline_mode<synchronous>, transform_indices = @transform_5, window_bounds = array<i64: 2, 6>}]} {
    %c0_i32 = arith.constant 0 : i32
    %0 = arith.cmpi eq, %arg0, %c0_i32 : i32
    %1 = arith.extui %0 : i1 to i32
    %c0_i32_0 = arith.constant 0 : i32
    %2 = arith.cmpi ne, %1, %c0_i32_0 : i32
    scf.if %2 {
      %cst_10 = arith.constant 0.000000e+00 : f32
      %12 = vector.broadcast %cst_10 : f32 to vector<2x30xf32>
      %c0_11 = arith.constant 0 : index
      %c0_12 = arith.constant 0 : index
      %13 = vector.load %arg7[%c0_11, %c0_12] : memref<2x30xf32, #tpu.memory_space<vmem>>, vector<2x30xf32>
      tpu.vector_store %arg7[%c0_11, %c0_12], %12 {strides = array<i32>} : memref<2x30xf32, #tpu.memory_space<vmem>>, vector<2x30xf32>,
    } else {
    }
    %c0 = arith.constant 0 : index
    %c0_1 = arith.constant 0 : index
    %3 = vector.load %arg1[%c0, %c0_1] : memref<2x12288xf32, #tpu.memory_space<vmem>>, vector<2x12288xf32>
    %c0_2 = arith.constant 0 : index
    %c0_3 = arith.constant 0 : index
    %4 = vector.load %arg2[%c0_2, %c0_3] : memref<30x12288xf32, #tpu.memory_space<vmem>>, vector<30x12288xf32>
    %c0_4 = arith.constant 0 : index
    %c0_5 = arith.constant 0 : index
    %5 = vector.load %arg7[%c0_4, %c0_5] : memref<2x30xf32, #tpu.memory_space<vmem>>, vector<2x30xf32>
    %cst = arith.constant dense<0.000000e+00> : vector<2x30xf32>
    %6 = tpu.matmul %3, %4, %cst {dimension_numbers = #tpu.dot_dimension_numbers<[1], [1], [0], [0], [0, 0, 1, 0], [], []>} : vector<2x12288xf32>, vector<30x12288xf32>, vector<2x30xf32> -> vector<2x30xf32>
    %7 = arith.addf %5, %6 : vector<2x30xf32>
    %c0_6 = arith.constant 0 : index
    %c0_7 = arith.constant 0 : index
    %8 = vector.load %arg7[%c0_6, %c0_7] : memref<2x30xf32, #tpu.memory_space<vmem>>, vector<2x30xf32>
    tpu.vector_store %arg7[%c0_6, %c0_7], %7 {strides = array<i32>} : memref<2x30xf32, #tpu.memory_space<vmem>>, vector<2x30xf32>,
    %c0_i32_8 = arith.constant 0 : i32
    %9 = arith.cmpi eq, %arg0, %c0_i32_8 : i32
    %10 = arith.extui %9 : i1 to i32
    %c0_i32_9 = arith.constant 0 : i32
    %11 = arith.cmpi ne, %10, %c0_i32_9 : i32
    scf.if %11 {
      %c0_10 = arith.constant 0 : index
      %c0_11 = arith.constant 0 : index
      %12 = vector.load %arg7[%c0_10, %c0_11] : memref<2x30xf32, #tpu.memory_space<vmem>>, vector<2x30xf32>
      %c0_12 = arith.constant 0 : index
      %c0_13 = arith.constant 0 : index
      %13 = vector.load %arg3[%c0_12, %c0_13] : memref<1x30xf32, #tpu.memory_space<vmem>>, vector<1x30xf32>
      %14 = vector.broadcast %13 : vector<1x30xf32> to vector<2x30xf32>
      %15 = arith.addf %12, %14 : vector<2x30xf32>
      %cst_14 = arith.constant 0.000000e+00 : f32
      %16 = vector.broadcast %cst_14 : f32 to vector<2x30xf32>
      %17 = arith.maximumf %15, %16 : vector<2x30xf32>
      %c0_15 = arith.constant 0 : index
      %c0_16 = arith.constant 0 : index
      %18 = vector.load %arg4[%c0_15, %c0_16] : memref<30x6xf32, #tpu.memory_space<vmem>>, vector<30x6xf32>
      %cst_17 = arith.constant dense<0.000000e+00> : vector<2x6xf32>
      %19 = tpu.matmul %17, %18, %cst_17 {dimension_numbers = #tpu.dot_dimension_numbers<[1], [0], [0], [1], [0, 0, 1, 1], [], []>} : vector<2x30xf32>, vector<30x6xf32>, vector<2x6xf32> -> vector<2x6xf32>
      %c0_18 = arith.constant 0 : index
      %c0_19 = arith.constant 0 : index
      %20 = vector.load %arg5[%c0_18, %c0_19] : memref<1x6xf32, #tpu.memory_space<vmem>>, vector<1x6xf32>
      %21 = vector.broadcast %20 : vector<1x6xf32> to vector<2x6xf32>
      %22 = arith.addf %19, %21 : vector<2x6xf32>
      %c0_20 = arith.constant 0 : index
      %c0_21 = arith.constant 0 : index
      %23 = vector.load %arg6[%c0_20, %c0_21] : memref<2x6xf32, #tpu.memory_space<vmem>>, vector<2x6xf32>
      tpu.vector_store %arg6[%c0_20, %c0_21], %22 {strides = array<i32>} : memref<2x6xf32, #tpu.memory_space<vmem>>, vector<2x6xf32>,
    } else {
    }
    return
  }
  func.func @transform_0(%arg0: i32) -> (i32, i32) {
    %c0_i32 = arith.constant 0 : i32
    %c0_i32_0 = arith.constant 0 : i32
    return %c0_i32, %arg0 : i32, i32
  }
  func.func @transform_1(%arg0: i32) -> (i32, i32) {
    %c0_i32 = arith.constant 0 : i32
    %c0_i32_0 = arith.constant 0 : i32
    return %c0_i32, %arg0 : i32, i32
  }
  func.func @transform_2(%arg0: i32) -> (i32, i32) {
    %c0_i32 = arith.constant 0 : i32
    %c0_i32_0 = arith.constant 0 : i32
    %c0_i32_1 = arith.constant 0 : i32
    return %c0_i32, %c0_i32_0 : i32, i32
  }
  func.func @transform_3(%arg0: i32) -> (i32, i32) {
    %c0_i32 = arith.constant 0 : i32
    %c0_i32_0 = arith.constant 0 : i32
    %c0_i32_1 = arith.constant 0 : i32
    return %c0_i32, %c0_i32_0 : i32, i32
  }
  func.func @transform_4(%arg0: i32) -> (i32, i32) {
    %c0_i32 = arith.constant 0 : i32
    %c0_i32_0 = arith.constant 0 : i32
    %c0_i32_1 = arith.constant 0 : i32
    return %c0_i32, %c0_i32_0 : i32, i32
  }
  func.func @transform_5(%arg0: i32) -> (i32, i32) {
    %c0_i32 = arith.constant 0 : i32
    %c0_i32_0 = arith.constant 0 : i32
    %c0_i32_1 = arith.constant 0 : i32
    return %c0_i32, %c0_i32_0 : i32, i32
  }
}

</mosaic_0001>

<llo_original>
// kernel: mlp_forward.1
$region0: #{mlp_forward.1}
  #allocation0 [shape = 'u32[]', space=smem, size = 0x4, offset = 0x4, fixed_abs, tag = 'smem constant byte address 0x4 - core index']
  #allocation1 [shape = 'u32[72,128]{1,0:T(1,128)}', space=vmem, size = 0x9000, scoped, tag = 'internal scratch']
  #allocation2 [shape = 'f32[2,30]{1,0:T(2,128)}', space=vmem, size = 0x400, scoped, tag = 'scratch operand']
  %s0 = inlined_call_operand.vmem [shape: f32[2,12288], index: 0, kind: input, shape index: {}]
  %s1 = inlined_call_operand.hbm [shape: f32[30,12288], index: 1, kind: input, shape index: {}]
  %s2 = inlined_call_operand.hbm [shape: f32[1,30], index: 2, kind: input, shape index: {}]
  %s3 = inlined_call_operand.vmem [shape: f32[30,6], index: 3, kind: input, shape index: {}]
  %s4 = inlined_call_operand.hbm [shape: f32[1,6], index: 4, kind: input, shape index: {}]
  %s5 = inlined_call_operand.hbm [shape: f32[2,6], index: 5, kind: output, shape index: {}]
  %s6 = sld [smem:[#allocation0]]
  $region50: #{mlp_forward.1} parent=0
    _
  %s8 = ssub.s32 1, %s6
  %s9 = scalar_select 0, %s8, %s6
  $region1: #{mlp_forward.1} parent=0
    #allocation3 [shape = 'u8[1572864]{0}', space=vmem, size = 0x180000, scoped, tag = 'input window, operand 1, single buffered']
    #allocation4 [shape = 's32[1]{0}', space=sflag, size = 0x4, scoped, tag = 'scoped memory for mlp_forward.1']
    #allocation5 [shape = 's32[1]{0}', space=sflag, size = 0x4, scoped, tag = 'scoped memory for mlp_forward.1']
    #allocation6 [shape = 'u8[512]{0}', space=vmem, size = 0x400, scoped, tag = 'input window, operand 2, single buffered']
    #allocation7 [shape = 's32[1]{0}', space=sflag, size = 0x4, scoped, tag = 'scoped memory for mlp_forward.1']
    #allocation8 [shape = 'u8[512]{0}', space=vmem, size = 0x400, scoped, tag = 'input window, operand 4, single buffered']
    #allocation9 [shape = 'u8[1024]{0}', space=vmem, size = 0x400, scoped, tag = 'output window, operand 0, single buffered']
    %10 = vsyncpa [#allocation4], 0
    %11 = vsyncpa [#allocation7], 0
    %12 = vsyncpa [#allocation5], 0
    // Predicated region
    $region2: #{mlp_forward.1} parent=1 // pred_check
      _
    $region3: #{mlp_forward.1} parent=1 // pred_check_branch
      %14 = sbr.rel (0) target = $region5
    $region4: #{mlp_forward.1} parent=1 // pred_region
      _
    $region5: #{mlp_forward.1} parent=1 // pred_fallthru
      _
    // Predicated region
    $region6: #{mlp_forward.1} parent=1 // pred_check
      _
    $region7: #{mlp_forward.1} parent=1 // pred_check_branch
      %16 = sbr.rel (0) target = $region9
    $region8: #{mlp_forward.1} parent=1 // pred_region
      %18 = vsyncadd [#allocation4], 0
      %s19 = sshll.u32 %s1, 4
      %s20 = int_to_ptr.hbm [resolvable:$true] %s19
      %s21 = sshll.u32 [#allocation3], 4
      %s22 = int_to_ptr.vmem [resolvable:$true] %s21
      %27 = dma.hbm_to_vmem [thread:$0]  %s20, 49152, %s22, [#allocation4], 12288, 12288, 768
    $region9: #{mlp_forward.1} parent=1 // pred_fallthru
      _
    // Predicated region
    $region10: #{mlp_forward.1} parent=1 // pred_check
      _
    $region11: #{mlp_forward.1} parent=1 // pred_check_branch
      %29 = sbr.rel (0) target = $region13
    $region12: #{mlp_forward.1} parent=1 // pred_region
      %31 = vsyncadd [#allocation7], 0
      %s33 = sshll.u32 %s2, 4
      %s34 = int_to_ptr.hbm [resolvable:$true] %s33
      %s35 = sshll.u32 [#allocation6], 4
      %s36 = int_to_ptr.vmem [resolvable:$true] %s35
      %38 = dma.hbm_to_vmem [thread:$0]  %s34, 16, %s36, [#allocation7]
    $region13: #{mlp_forward.1} parent=1 // pred_fallthru
      _
    // Predicated region
    $region14: #{mlp_forward.1} parent=1 // pred_check
      _
    $region15: #{mlp_forward.1} parent=1 // pred_check_branch
      %40 = sbr.rel (0) target = $region17
    $region16: #{mlp_forward.1} parent=1 // pred_region
      _
    $region17: #{mlp_forward.1} parent=1 // pred_fallthru
      _
    // Predicated region
    $region18: #{mlp_forward.1} parent=1 // pred_check
      _
    $region19: #{mlp_forward.1} parent=1 // pred_check_branch
      %42 = sbr.rel (0) target = $region21
    $region20: #{mlp_forward.1} parent=1 // pred_region
      %44 = vsyncadd [#allocation7], 0
      %s46 = sshll.u32 %s4, 4
      %s47 = int_to_ptr.hbm [resolvable:$true] %s46
      %s48 = sshll.u32 [#allocation8], 4
      %s49 = int_to_ptr.vmem [resolvable:$true] %s48
      %51 = dma.hbm_to_vmem [thread:$0]  %s47, 16, %s49, [#allocation7]
    $region21: #{mlp_forward.1} parent=1 // pred_fallthru
      _
    // Predicated region
    $region22: #{mlp_forward.1} parent=1 // pred_check
      _
    $region23: #{mlp_forward.1} parent=1 // pred_check_branch
      %53 = sbr.rel (0) target = $region25
    $region24: #{mlp_forward.1} parent=1 // pred_region
      %55 = dma.done [#allocation4], 49152
    $region25: #{mlp_forward.1} parent=1 // pred_fallthru
      _
    // Predicated region
    $region26: #{mlp_forward.1} parent=1 // pred_check
      _
    $region27: #{mlp_forward.1} parent=1 // pred_check_branch
      %57 = sbr.rel (0) target = $region29
    $region28: #{mlp_forward.1} parent=1 // pred_region
      %59 = dma.done [#allocation7], 16
    $region29: #{mlp_forward.1} parent=1 // pred_fallthru
      _
    // Predicated region
    $region30: #{mlp_forward.1} parent=1 // pred_check
      _
    $region31: #{mlp_forward.1} parent=1 // pred_check_branch
      %61 = sbr.rel (0) target = $region33
    $region32: #{mlp_forward.1} parent=1 // pred_region
      %63 = dma.done [#allocation7], 16
    $region33: #{mlp_forward.1} parent=1 // pred_fallthru
      _
    %p64 = scmp.eq.s32.totalorder 0, 0
    // Predicated region
    $region34: #{mlp_forward.1} parent=1 // pred_check
      %p65 = pneg %p64
    $region35: #{mlp_forward.1} parent=1 // pred_check_branch
      %67 = sbr.rel (%p65) target = $region37
    $region36: #{mlp_forward.1} parent=1 // pred_region
      %vm68 = vcmask 238592
      %69 = vst.msk [vmem:[#allocation2] sm:$0x3] %vm68, 0.0
    $region37: #{mlp_forward.1} parent=1 // pred_fallthru
      _
    %v70 = vld [vmem:[%s0] sm:$0xff]
    %v71 = vld [vmem:[%s0 + $0x8] sm:$0xff]
    %v72 = vld [vmem:[%s0 + $0x10] sm:$0xff]
    %v73 = vld [vmem:[%s0 + $0x18] sm:$0xff]
    %v74 = vld [vmem:[%s0 + $0x20] sm:$0xff]
    %v75 = vld [vmem:[%s0 + $0x28] sm:$0xff]
    %v76 = vld [vmem:[%s0 + $0x30] sm:$0xff]
    %v77 = vld [vmem:[%s0 + $0x38] sm:$0xff]
    %v78 = vld [vmem:[%s0 + $0x40] sm:$0xff]
    %v79 = vld [vmem:[%s0 + $0x48] sm:$0xff]
    %v80 = vld [vmem:[%s0 + $0x50] sm:$0xff]
    %v81 = vld [vmem:[%s0 + $0x58] sm:$0xff]
    %v82 = vld [vmem:[%s0 + $0x60] sm:$0xff]
    %v83 = vld [vmem:[%s0 + $0x68] sm:$0xff]
    %v84 = vld [vmem:[%s0 + $0x70] sm:$0xff]
    %v85 = vld [vmem:[%s0 + $0x78] sm:$0xff]
    %v86 = vld [vmem:[%s0 + $0x80] sm:$0xff]
    %v87 = vld [vmem:[%s0 + $0x88] sm:$0xff]
    %v88 = vld [vmem:[%s0 + $0x90] sm:$0xff]
    %v89 = vld [vmem:[%s0 + $0x98] sm:$0xff]
    %v90 = vld [vmem:[%s0 + $0xa0] sm:$0xff]
    %v91 = vld [vmem:[%s0 + $0xa8] sm:$0xff]
    %v92 = vld [vmem:[%s0 + $0xb0] sm:$0xff]
    %v93 = vld [vmem:[%s0 + $0xb8] sm:$0xff]
    %v94 = vld [vmem:[#allocation3] sm:$0xff]
    %v95 = vld [vmem:[#allocation3 + $0x8] sm:$0xff]
    %v96 = vld [vmem:[#allocation3 + $0x10] sm:$0xff]
    %v97 = vld [vmem:[#allocation3 + $0x18] sm:$0xff]
    %v98 = vld [vmem:[#allocation3 + $0x20] sm:$0xff]
    %v99 = vld [vmem:[#allocation3 + $0x28] sm:$0xff]
    %v100 = vld [vmem:[#allocation3 + $0x30] sm:$0xff]
    %v101 = vld [vmem:[#allocation3 + $0x38] sm:$0xff]
    %v102 = vld [vmem:[#allocation3 + $0x40] sm:$0xff]
    %v103 = vld [vmem:[#allocation3 + $0x48] sm:$0xff]
    %v104 = vld [vmem:[#allocation3 + $0x50] sm:$0xff]
    %v105 = vld [vmem:[#allocation3 + $0x58] sm:$0xff]
    %v106 = vld [vmem:[#allocation3 + $0x60] sm:$0xff]
    %v107 = vld [vmem:[#allocation3 + $0x68] sm:$0xff]
    %v108 = vld [vmem:[#allocation3 + $0x70] sm:$0xff]
    %v109 = vld [vmem:[#allocation3 + $0x78] sm:$0xff]
    %v110 = vld [vmem:[#allocation3 + $0x80] sm:$0xff]
    %v111 = vld [vmem:[#allocation3 + $0x88] sm:$0xff]
    %v112 = vld [vmem:[#allocation3 + $0x90] sm:$0xff]
    %v113 = vld [vmem:[#allocation3 + $0x98] sm:$0xff]
    %v114 = vld [vmem:[#allocation3 + $0xa0] sm:$0xff]
    %v115 = vld [vmem:[#allocation3 + $0xa8] sm:$0xff]
    %v116 = vld [vmem:[#allocation3 + $0xb0] sm:$0xff]
    %v117 = vld [vmem:[#allocation3 + $0xb8] sm:$0xff]
    %v118 = vld [vmem:[#allocation3 + $0xc0] sm:$0xff]
    %v119 = vld [vmem:[#allocation3 + $0xc8] sm:$0xff]
    %v120 = vld [vmem:[#allocation3 + $0xd0] sm:$0xff]
    %v121 = vld [vmem:[#allocation3 + $0xd8] sm:$0xff]
    %v122 = vld [vmem:[#allocation3 + $0xe0] sm:$0xff]
    %v123 = vld [vmem:[#allocation3 + $0xe8] sm:$0xff]
    %v124 = vld [vmem:[#allocation3 + $0xf0] sm:$0xff]
    %v125 = vld [vmem:[#allocation3 + $0xf8] sm:$0xff]
    %v126 = vld [vmem:[#allocation3 + $0x100] sm:$0xff]
    %v127 = vld [vmem:[#allocation3 + $0x108] sm:$0xff]
    %v128 = vld [vmem:[#allocation3 + $0x110] sm:$0xff]
    %v129 = vld [vmem:[#allocation3 + $0x118] sm:$0xff]
    %v130 = vld [vmem:[#allocation3 + $0x120] sm:$0xff]
    %v131 = vld [vmem:[#allocation3 + $0x128] sm:$0xff]
    %v132 = vld [vmem:[#allocation3 + $0x130] sm:$0xff]
    %v133 = vld [vmem:[#allocation3 + $0x138] sm:$0xff]
    %v134 = vld [vmem:[#allocation3 + $0x140] sm:$0xff]
    %v135 = vld [vmem:[#allocation3 + $0x148] sm:$0xff]
    %v136 = vld [vmem:[#allocation3 + $0x150] sm:$0xff]
    %v137 = vld [vmem:[#allocation3 + $0x158] sm:$0xff]
    %v138 = vld [vmem:[#allocation3 + $0x160] sm:$0xff]
    %v139 = vld [vmem:[#allocation3 + $0x168] sm:$0xff]
    %v140 = vld [vmem:[#allocation3 + $0x170] sm:$0xff]
    %v141 = vld [vmem:[#allocation3 + $0x178] sm:$0xff]
    %v142 = vld [vmem:[#allocation3 + $0x180] sm:$0xff]
    %v143 = vld [vmem:[#allocation3 + $0x188] sm:$0xff]
    %v144 = vld [vmem:[#allocation3 + $0x190] sm:$0xff]
    %v145 = vld [vmem:[#allocation3 + $0x198] sm:$0xff]
    %v146 = vld [vmem:[#allocation3 + $0x1a0] sm:$0xff]
    %v147 = vld [vmem:[#allocation3 + $0x1a8] sm:$0xff]
    %v148 = vld [vmem:[#allocation3 + $0x1b0] sm:$0xff]
    %v149 = vld [vmem:[#allocation3 + $0x1b8] sm:$0xff]
    %v150 = vld [vmem:[#allocation3 + $0x1c0] sm:$0xff]
    %v151 = vld [vmem:[#allocation3 + $0x1c8] sm:$0xff]
    %v152 = vld [vmem:[#allocation3 + $0x1d0] sm:$0xff]
    %v153 = vld [vmem:[#allocation3 + $0x1d8] sm:$0xff]
    %v154 = vld [vmem:[#allocation3 + $0x1e0] sm:$0xff]
    %v155 = vld [vmem:[#allocation3 + $0x1e8] sm:$0xff]
    %v156 = vld [vmem:[#allocation3 + $0x1f0] sm:$0xff]
    %v157 = vld [vmem:[#allocation3 + $0x1f8] sm:$0xff]
    %v158 = vld [vmem:[#allocation3 + $0x200] sm:$0xff]
    %v159 = vld [vmem:[#allocation3 + $0x208] sm:$0xff]
    %v160 = vld [vmem:[#allocation3 + $0x210] sm:$0xff]
    %v161 = vld [vmem:[#allocation3 + $0x218] sm:$0xff]
    %v162 = vld [vmem:[#allocation3 + $0x220] sm:$0xff]
    %v163 = vld [vmem:[#allocation3 + $0x228] sm:$0xff]
    %v164 = vld [vmem:[#allocation3 + $0x230] sm:$0xff]
    %v165 = vld [vmem:[#allocation3 + $0x238] sm:$0xff]
    %v166 = vld [vmem:[#allocation3 + $0x240] sm:$0xff]
    %v167 = vld [vmem:[#allocation3 + $0x248] sm:$0xff]
    %v168 = vld [vmem:[#allocation3 + $0x250] sm:$0xff]
    %v169 = vld [vmem:[#allocation3 + $0x258] sm:$0xff]
    %v170 = vld [vmem:[#allocation3 + $0x260] sm:$0xff]
    %v171 = vld [vmem:[#allocation3 + $0x268] sm:$0xff]
    %v172 = vld [vmem:[#allocation3 + $0x270] sm:$0xff]
    %v173 = vld [vmem:[#allocation3 + $0x278] sm:$0xff]
    %v174 = vld [vmem:[#allocation3 + $0x280] sm:$0xff]
    %v175 = vld [vmem:[#allocation3 + $0x288] sm:$0xff]
    %v176 = vld [vmem:[#allocation3 + $0x290] sm:$0xff]
    %v177 = vld [vmem:[#allocation3 + $0x298] sm:$0xff]
    %v178 = vld [vmem:[#allocation3 + $0x2a0] sm:$0xff]
    %v179 = vld [vmem:[#allocation3 + $0x2a8] sm:$0xff]
    %v180 = vld [vmem:[#allocation3 + $0x2b0] sm:$0xff]
    %v181 = vld [vmem:[#allocation3 + $0x2b8] sm:$0xff]
    %v182 = vld [vmem:[#allocation3 + $0x2c0] sm:$0xff]
    %v183 = vld [vmem:[#allocation3 + $0x2c8] sm:$0xff]
    %v184 = vld [vmem:[#allocation3 + $0x2d0] sm:$0xff]
    %v185 = vld [vmem:[#allocation3 + $0x2d8] sm:$0xff]
    %v186 = vld [vmem:[#allocation3 + $0x2e0] sm:$0xff]
    %v187 = vld [vmem:[#allocation3 + $0x2e8] sm:$0xff]
    %v188 = vld [vmem:[#allocation3 + $0x2f0] sm:$0xff]
    %v189 = vld [vmem:[#allocation3 + $0x2f8] sm:$0xff]
    %v190 = vld [vmem:[#allocation3 + $0x300] sm:$0xff]
    %v191 = vld [vmem:[#allocation3 + $0x308] sm:$0xff]
    %v192 = vld [vmem:[#allocation3 + $0x310] sm:$0xff]
    %v193 = vld [vmem:[#allocation3 + $0x318] sm:$0xff]
    %v194 = vld [vmem:[#allocation3 + $0x320] sm:$0xff]
    %v195 = vld [vmem:[#allocation3 + $0x328] sm:$0xff]
    %v196 = vld [vmem:[#allocation3 + $0x330] sm:$0xff]
    %v197 = vld [vmem:[#allocation3 + $0x338] sm:$0xff]
    %v198 = vld [vmem:[#allocation3 + $0x340] sm:$0xff]
    %v199 = vld [vmem:[#allocation3 + $0x348] sm:$0xff]
    %v200 = vld [vmem:[#allocation3 + $0x350] sm:$0xff]
    %v201 = vld [vmem:[#allocation3 + $0x358] sm:$0xff]
    %v202 = vld [vmem:[#allocation3 + $0x360] sm:$0xff]
    %v203 = vld [vmem:[#allocation3 + $0x368] sm:$0xff]
    %v204 = vld [vmem:[#allocation3 + $0x370] sm:$0xff]
    %v205 = vld [vmem:[#allocation3 + $0x378] sm:$0xff]
    %v206 = vld [vmem:[#allocation3 + $0x380] sm:$0xff]
    %v207 = vld [vmem:[#allocation3 + $0x388] sm:$0xff]
    %v208 = vld [vmem:[#allocation3 + $0x390] sm:$0xff]
    %v209 = vld [vmem:[#allocation3 + $0x398] sm:$0xff]
    %v210 = vld [vmem:[#allocation3 + $0x3a0] sm:$0xff]
    %v211 = vld [vmem:[#allocation3 + $0x3a8] sm:$0xff]
    %v212 = vld [vmem:[#allocation3 + $0x3b0] sm:$0xff]
    %v213 = vld [vmem:[#allocation3 + $0x3b8] sm:$0xff]
    %v214 = vld [vmem:[#allocation3 + $0x3c0] sm:$0xff]
    %v215 = vld [vmem:[#allocation3 + $0x3c8] sm:$0xff]
    %v216 = vld [vmem:[#allocation3 + $0x3d0] sm:$0xff]
    %v217 = vld [vmem:[#allocation3 + $0x3d8] sm:$0xff]
    %v218 = vld [vmem:[#allocation3 + $0x3e0] sm:$0xff]
    %v219 = vld [vmem:[#allocation3 + $0x3e8] sm:$0xff]
    %v220 = vld [vmem:[#allocation3 + $0x3f0] sm:$0xff]
    %v221 = vld [vmem:[#allocation3 + $0x3f8] sm:$0xff]
    %v222 = vld [vmem:[#allocation3 + $0x400] sm:$0xff]
    %v223 = vld [vmem:[#allocation3 + $0x408] sm:$0xff]
    %v224 = vld [vmem:[#allocation3 + $0x410] sm:$0xff]
    %v225 = vld [vmem:[#allocation3 + $0x418] sm:$0xff]
    %v226 = vld [vmem:[#allocation3 + $0x420] sm:$0xff]
    %v227 = vld [vmem:[#allocation3 + $0x428] sm:$0xff]
    %v228 = vld [vmem:[#allocation3 + $0x430] sm:$0xff]
    %v229 = vld [vmem:[#allocation3 + $0x438] sm:$0xff]
    %v230 = vld [vmem:[#allocation3 + $0x440] sm:$0xff]
    %v231 = vld [vmem:[#allocation3 + $0x448] sm:$0xff]
    %v232 = vld [vmem:[#allocation3 + $0x450] sm:$0xff]
    %v233 = vld [vmem:[#allocation3 + $0x458] sm:$0xff]
    %v234 = vld [vmem:[#allocation3 + $0x460] sm:$0xff]
    %v235 = vld [vmem:[#allocation3 + $0x468] sm:$0xff]
    %v236 = vld [vmem:[#allocation3 + $0x470] sm:$0xff]
    %v237 = vld [vmem:[#allocation3 + $0x478] sm:$0xff]
    %v238 = vld [vmem:[#allocation3 + $0x480] sm:$0xff]
    %v239 = vld [vmem:[#allocation3 + $0x488] sm:$0xff]
    %v240 = vld [vmem:[#allocation3 + $0x490] sm:$0xff]
    %v241 = vld [vmem:[#allocation3 + $0x498] sm:$0xff]
    %v242 = vld [vmem:[#allocation3 + $0x4a0] sm:$0xff]
    %v243 = vld [vmem:[#allocation3 + $0x4a8] sm:$0xff]
    %v244 = vld [vmem:[#allocation3 + $0x4b0] sm:$0xff]
    %v245 = vld [vmem:[#allocation3 + $0x4b8] sm:$0xff]
    %v246 = vld [vmem:[#allocation3 + $0x4c0] sm:$0xff]
    %v247 = vld [vmem:[#allocation3 + $0x4c8] sm:$0xff]
    %v248 = vld [vmem:[#allocation3 + $0x4d0] sm:$0xff]
    %v249 = vld [vmem:[#allocation3 + $0x4d8] sm:$0xff]
    %v250 = vld [vmem:[#allocation3 + $0x4e0] sm:$0xff]
    %v251 = vld [vmem:[#allocation3 + $0x4e8] sm:$0xff]
    %v252 = vld [vmem:[#allocation3 + $0x4f0] sm:$0xff]
    %v253 = vld [vmem:[#allocation3 + $0x4f8] sm:$0xff]
    %v254 = vld [vmem:[#allocation3 + $0x500] sm:$0xff]
    %v255 = vld [vmem:[#allocation3 + $0x508] sm:$0xff]
    %v256 = vld [vmem:[#allocation3 + $0x510] sm:$0xff]
    %v257 = vld [vmem:[#allocation3 + $0x518] sm:$0xff]
    %v258 = vld [vmem:[#allocation3 + $0x520] sm:$0xff]
    %v259 = vld [vmem:[#allocation3 + $0x528] sm:$0xff]
    %v260 = vld [vmem:[#allocation3 + $0x530] sm:$0xff]
    %v261 = vld [vmem:[#allocation3 + $0x538] sm:$0xff]
    %v262 = vld [vmem:[#allocation3 + $0x540] sm:$0xff]
    %v263 = vld [vmem:[#allocation3 + $0x548] sm:$0xff]
    %v264 = vld [vmem:[#allocation3 + $0x550] sm:$0xff]
    %v265 = vld [vmem:[#allocation3 + $0x558] sm:$0xff]
    %v266 = vld [vmem:[#allocation3 + $0x560] sm:$0xff]
    %v267 = vld [vmem:[#allocation3 + $0x568] sm:$0xff]
    %v268 = vld [vmem:[#allocation3 + $0x570] sm:$0xff]
    %v269 = vld [vmem:[#allocation3 + $0x578] sm:$0xff]
    %v270 = vld [vmem:[#allocation3 + $0x580] sm:$0xff]
    %v271 = vld [vmem:[#allocation3 + $0x588] sm:$0xff]
    %v272 = vld [vmem:[#allocation3 + $0x590] sm:$0xff]
    %v273 = vld [vmem:[#allocation3 + $0x598] sm:$0xff]
    %v274 = vld [vmem:[#allocation3 + $0x5a0] sm:$0xff]
    %v275 = vld [vmem:[#allocation3 + $0x5a8] sm:$0xff]
    %v276 = vld [vmem:[#allocation3 + $0x5b0] sm:$0xff]
    %v277 = vld [vmem:[#allocation3 + $0x5b8] sm:$0xff]
    %v278 = vld [vmem:[#allocation3 + $0x5c0] sm:$0xff]
    %v279 = vld [vmem:[#allocation3 + $0x5c8] sm:$0xff]
    %v280 = vld [vmem:[#allocation3 + $0x5d0] sm:$0xff]
    %v281 = vld [vmem:[#allocation3 + $0x5d8] sm:$0xff]
    %v282 = vld [vmem:[#allocation3 + $0x5e0] sm:$0xff]
    %v283 = vld [vmem:[#allocation3 + $0x5e8] sm:$0xff]
    %v284 = vld [vmem:[#allocation3 + $0x5f0] sm:$0xff]
    %v285 = vld [vmem:[#allocation3 + $0x5f8] sm:$0xff]
    %v286 = vld [vmem:[#allocation3 + $0x600] sm:$0xff]
    %v287 = vld [vmem:[#allocation3 + $0x608] sm:$0xff]
    %v288 = vld [vmem:[#allocation3 + $0x610] sm:$0xff]
    %v289 = vld [vmem:[#allocation3 + $0x618] sm:$0xff]
    %v290 = vld [vmem:[#allocation3 + $0x620] sm:$0xff]
    %v291 = vld [vmem:[#allocation3 + $0x628] sm:$0xff]
    %v292 = vld [vmem:[#allocation3 + $0x630] sm:$0xff]
    %v293 = vld [vmem:[#allocation3 + $0x638] sm:$0xff]
    %v294 = vld [vmem:[#allocation3 + $0x640] sm:$0xff]
    %v295 = vld [vmem:[#allocation3 + $0x648] sm:$0xff]
    %v296 = vld [vmem:[#allocation3 + $0x650] sm:$0xff]
    %v297 = vld [vmem:[#allocation3 + $0x658] sm:$0xff]
    %v298 = vld [vmem:[#allocation3 + $0x660] sm:$0xff]
    %v299 = vld [vmem:[#allocation3 + $0x668] sm:$0xff]
    %v300 = vld [vmem:[#allocation3 + $0x670] sm:$0xff]
    %v301 = vld [vmem:[#allocation3 + $0x678] sm:$0xff]
    %v302 = vld [vmem:[#allocation3 + $0x680] sm:$0xff]
    %v303 = vld [vmem:[#allocation3 + $0x688] sm:$0xff]
    %v304 = vld [vmem:[#allocation3 + $0x690] sm:$0xff]
    %v305 = vld [vmem:[#allocation3 + $0x698] sm:$0xff]
    %v306 = vld [vmem:[#allocation3 + $0x6a0] sm:$0xff]
    %v307 = vld [vmem:[#allocation3 + $0x6a8] sm:$0xff]
    %v308 = vld [vmem:[#allocation3 + $0x6b0] sm:$0xff]
    %v309 = vld [vmem:[#allocation3 + $0x6b8] sm:$0xff]
    %v310 = vld [vmem:[#allocation3 + $0x6c0] sm:$0xff]
    %v311 = vld [vmem:[#allocation3 + $0x6c8] sm:$0xff]
    %v312 = vld [vmem:[#allocation3 + $0x6d0] sm:$0xff]
    %v313 = vld [vmem:[#allocation3 + $0x6d8] sm:$0xff]
    %v314 = vld [vmem:[#allocation3 + $0x6e0] sm:$0xff]
    %v315 = vld [vmem:[#allocation3 + $0x6e8] sm:$0xff]
    %v316 = vld [vmem:[#allocation3 + $0x6f0] sm:$0xff]
    %v317 = vld [vmem:[#allocation3 + $0x6f8] sm:$0xff]
    %v318 = vld [vmem:[#allocation3 + $0x700] sm:$0xff]
    %v319 = vld [vmem:[#allocation3 + $0x708] sm:$0xff]
    %v320 = vld [vmem:[#allocation3 + $0x710] sm:$0xff]
    %v321 = vld [vmem:[#allocation3 + $0x718] sm:$0xff]
    %v322 = vld [vmem:[#allocation3 + $0x720] sm:$0xff]
    %v323 = vld [vmem:[#allocation3 + $0x728] sm:$0xff]
    %v324 = vld [vmem:[#allocation3 + $0x730] sm:$0xff]
    %v325 = vld [vmem:[#allocation3 + $0x738] sm:$0xff]
    %v326 = vld [vmem:[#allocation3 + $0x740] sm:$0xff]
    %v327 = vld [vmem:[#allocation3 + $0x748] sm:$0xff]
    %v328 = vld [vmem:[#allocation3 + $0x750] sm:$0xff]
    %v329 = vld [vmem:[#allocation3 + $0x758] sm:$0xff]
    %v330 = vld [vmem:[#allocation3 + $0x760] sm:$0xff]
    %v331 = vld [vmem:[#allocation3 + $0x768] sm:$0xff]
    %v332 = vld [vmem:[#allocation3 + $0x770] sm:$0xff]
    %v333 = vld [vmem:[#allocation3 + $0x778] sm:$0xff]
    %v334 = vld [vmem:[#allocation3 + $0x780] sm:$0xff]
    %v335 = vld [vmem:[#allocation3 + $0x788] sm:$0xff]
    %v336 = vld [vmem:[#allocation3 + $0x790] sm:$0xff]
    %v337 = vld [vmem:[#allocation3 + $0x798] sm:$0xff]
    %v338 = vld [vmem:[#allocation3 + $0x7a0] sm:$0xff]
    %v339 = vld [vmem:[#allocation3 + $0x7a8] sm:$0xff]
    %v340 = vld [vmem:[#allocation3 + $0x7b0] sm:$0xff]
    %v341 = vld [vmem:[#allocation3 + $0x7b8] sm:$0xff]
    %v342 = vld [vmem:[#allocation3 + $0x7c0] sm:$0xff]
    %v343 = vld [vmem:[#allocation3 + $0x7c8] sm:$0xff]
    %v344 = vld [vmem:[#allocation3 + $0x7d0] sm:$0xff]
    %v345 = vld [vmem:[#allocation3 + $0x7d8] sm:$0xff]
    %v346 = vld [vmem:[#allocation3 + $0x7e0] sm:$0xff]
    %v347 = vld [vmem:[#allocation3 + $0x7e8] sm:$0xff]
    %v348 = vld [vmem:[#allocation3 + $0x7f0] sm:$0xff]
    %v349 = vld [vmem:[#allocation3 + $0x7f8] sm:$0xff]
    %v350 = vld [vmem:[#allocation3 + $0x800] sm:$0xff]
    %v351 = vld [vmem:[#allocation3 + $0x808] sm:$0xff]
    %v352 = vld [vmem:[#allocation3 + $0x810] sm:$0xff]
    %v353 = vld [vmem:[#allocation3 + $0x818] sm:$0xff]
    %v354 = vld [vmem:[#allocation3 + $0x820] sm:$0xff]
    %v355 = vld [vmem:[#allocation3 + $0x828] sm:$0xff]
    %v356 = vld [vmem:[#allocation3 + $0x830] sm:$0xff]
    %v357 = vld [vmem:[#allocation3 + $0x838] sm:$0xff]
    %v358 = vld [vmem:[#allocation3 + $0x840] sm:$0xff]
    %v359 = vld [vmem:[#allocation3 + $0x848] sm:$0xff]
    %v360 = vld [vmem:[#allocation3 + $0x850] sm:$0xff]
    %v361 = vld [vmem:[#allocation3 + $0x858] sm:$0xff]
    %v362 = vld [vmem:[#allocation3 + $0x860] sm:$0xff]
    %v363 = vld [vmem:[#allocation3 + $0x868] sm:$0xff]
    %v364 = vld [vmem:[#allocation3 + $0x870] sm:$0xff]
    %v365 = vld [vmem:[#allocation3 + $0x878] sm:$0xff]
    %v366 = vld [vmem:[#allocation3 + $0x880] sm:$0xff]
    %v367 = vld [vmem:[#allocation3 + $0x888] sm:$0xff]
    %v368 = vld [vmem:[#allocation3 + $0x890] sm:$0xff]
    %v369 = vld [vmem:[#allocation3 + $0x898] sm:$0xff]
    %v370 = vld [vmem:[#allocation3 + $0x8a0] sm:$0xff]
    %v371 = vld [vmem:[#allocation3 + $0x8a8] sm:$0xff]
    %v372 = vld [vmem:[#allocation3 + $0x8b0] sm:$0xff]
    %v373 = vld [vmem:[#allocation3 + $0x8b8] sm:$0xff]
    %v374 = vld [vmem:[#allocation3 + $0x8c0] sm:$0xff]
    %v375 = vld [vmem:[#allocation3 + $0x8c8] sm:$0xff]
    %v376 = vld [vmem:[#allocation3 + $0x8d0] sm:$0xff]
    %v377 = vld [vmem:[#allocation3 + $0x8d8] sm:$0xff]
    %v378 = vld [vmem:[#allocation3 + $0x8e0] sm:$0xff]
    %v379 = vld [vmem:[#allocation3 + $0x8e8] sm:$0xff]
    %v380 = vld [vmem:[#allocation3 + $0x8f0] sm:$0xff]
    %v381 = vld [vmem:[#allocation3 + $0x8f8] sm:$0xff]
    %v382 = vld [vmem:[#allocation3 + $0x900] sm:$0x3f]
    %v383 = vld [vmem:[#allocation3 + $0x908] sm:$0x3f]
    %v384 = vld [vmem:[#allocation3 + $0x910] sm:$0x3f]
    %v385 = vld [vmem:[#allocation3 + $0x918] sm:$0x3f]
    %v386 = vld [vmem:[#allocation3 + $0x920] sm:$0x3f]
    %v387 = vld [vmem:[#allocation3 + $0x928] sm:$0x3f]
    %v388 = vld [vmem:[#allocation3 + $0x930] sm:$0x3f]
    %v389 = vld [vmem:[#allocation3 + $0x938] sm:$0x3f]
    %v390 = vld [vmem:[#allocation3 + $0x940] sm:$0x3f]
    %v391 = vld [vmem:[#allocation3 + $0x948] sm:$0x3f]
    %v392 = vld [vmem:[#allocation3 + $0x950] sm:$0x3f]
    %v393 = vld [vmem:[#allocation3 + $0x958] sm:$0x3f]
    %v394 = vld [vmem:[#allocation3 + $0x960] sm:$0x3f]
    %v395 = vld [vmem:[#allocation3 + $0x968] sm:$0x3f]
    %v396 = vld [vmem:[#allocation3 + $0x970] sm:$0x3f]
    %v397 = vld [vmem:[#allocation3 + $0x978] sm:$0x3f]
    %v398 = vld [vmem:[#allocation3 + $0x980] sm:$0x3f]
    %v399 = vld [vmem:[#allocation3 + $0x988] sm:$0x3f]
    %v400 = vld [vmem:[#allocation3 + $0x990] sm:$0x3f]
    %v401 = vld [vmem:[#allocation3 + $0x998] sm:$0x3f]
    %v402 = vld [vmem:[#allocation3 + $0x9a0] sm:$0x3f]
    %v403 = vld [vmem:[#allocation3 + $0x9a8] sm:$0x3f]
    %v404 = vld [vmem:[#allocation3 + $0x9b0] sm:$0x3f]
    %v405 = vld [vmem:[#allocation3 + $0x9b8] sm:$0x3f]
    %v406 = vld [vmem:[#allocation3 + $0x9c0] sm:$0x3f]
    %v407 = vld [vmem:[#allocation3 + $0x9c8] sm:$0x3f]
    %v408 = vld [vmem:[#allocation3 + $0x9d0] sm:$0x3f]
    %v409 = vld [vmem:[#allocation3 + $0x9d8] sm:$0x3f]
    %v410 = vld [vmem:[#allocation3 + $0x9e0] sm:$0x3f]
    %v411 = vld [vmem:[#allocation3 + $0x9e8] sm:$0x3f]
    %v412 = vld [vmem:[#allocation3 + $0x9f0] sm:$0x3f]
    %v413 = vld [vmem:[#allocation3 + $0x9f8] sm:$0x3f]
    %v414 = vld [vmem:[#allocation3 + $0xa00] sm:$0x3f]
    %v415 = vld [vmem:[#allocation3 + $0xa08] sm:$0x3f]
    %v416 = vld [vmem:[#allocation3 + $0xa10] sm:$0x3f]
    %v417 = vld [vmem:[#allocation3 + $0xa18] sm:$0x3f]
    %v418 = vld [vmem:[#allocation3 + $0xa20] sm:$0x3f]
    %v419 = vld [vmem:[#allocation3 + $0xa28] sm:$0x3f]
    %v420 = vld [vmem:[#allocation3 + $0xa30] sm:$0x3f]
    %v421 = vld [vmem:[#allocation3 + $0xa38] sm:$0x3f]
    %v422 = vld [vmem:[#allocation3 + $0xa40] sm:$0x3f]
    %v423 = vld [vmem:[#allocation3 + $0xa48] sm:$0x3f]
    %v424 = vld [vmem:[#allocation3 + $0xa50] sm:$0x3f]
    %v425 = vld [vmem:[#allocation3 + $0xa58] sm:$0x3f]
    %v426 = vld [vmem:[#allocation3 + $0xa60] sm:$0x3f]
    %v427 = vld [vmem:[#allocation3 + $0xa68] sm:$0x3f]
    %v428 = vld [vmem:[#allocation3 + $0xa70] sm:$0x3f]
    %v429 = vld [vmem:[#allocation3 + $0xa78] sm:$0x3f]
    %v430 = vld [vmem:[#allocation3 + $0xa80] sm:$0x3f]
    %v431 = vld [vmem:[#allocation3 + $0xa88] sm:$0x3f]
    %v432 = vld [vmem:[#allocation3 + $0xa90] sm:$0x3f]
    %v433 = vld [vmem:[#allocation3 + $0xa98] sm:$0x3f]
    %v434 = vld [vmem:[#allocation3 + $0xaa0] sm:$0x3f]
    %v435 = vld [vmem:[#allocation3 + $0xaa8] sm:$0x3f]
    %v436 = vld [vmem:[#allocation3 + $0xab0] sm:$0x3f]
    %v437 = vld [vmem:[#allocation3 + $0xab8] sm:$0x3f]
    %v438 = vld [vmem:[#allocation3 + $0xac0] sm:$0x3f]
    %v439 = vld [vmem:[#allocation3 + $0xac8] sm:$0x3f]
    %v440 = vld [vmem:[#allocation3 + $0xad0] sm:$0x3f]
    %v441 = vld [vmem:[#allocation3 + $0xad8] sm:$0x3f]
    %v442 = vld [vmem:[#allocation3 + $0xae0] sm:$0x3f]
    %v443 = vld [vmem:[#allocation3 + $0xae8] sm:$0x3f]
    %v444 = vld [vmem:[#allocation3 + $0xaf0] sm:$0x3f]
    %v445 = vld [vmem:[#allocation3 + $0xaf8] sm:$0x3f]
    %v446 = vld [vmem:[#allocation3 + $0xb00] sm:$0x3f]
    %v447 = vld [vmem:[#allocation3 + $0xb08] sm:$0x3f]
    %v448 = vld [vmem:[#allocation3 + $0xb10] sm:$0x3f]
    %v449 = vld [vmem:[#allocation3 + $0xb18] sm:$0x3f]
    %v450 = vld [vmem:[#allocation3 + $0xb20] sm:$0x3f]
    %v451 = vld [vmem:[#allocation3 + $0xb28] sm:$0x3f]
    %v452 = vld [vmem:[#allocation3 + $0xb30] sm:$0x3f]
    %v453 = vld [vmem:[#allocation3 + $0xb38] sm:$0x3f]
    %v454 = vld [vmem:[#allocation3 + $0xb40] sm:$0x3f]
    %v455 = vld [vmem:[#allocation3 + $0xb48] sm:$0x3f]
    %v456 = vld [vmem:[#allocation3 + $0xb50] sm:$0x3f]
    %v457 = vld [vmem:[#allocation3 + $0xb58] sm:$0x3f]
    %v458 = vld [vmem:[#allocation3 + $0xb60] sm:$0x3f]
    %v459 = vld [vmem:[#allocation3 + $0xb68] sm:$0x3f]
    %v460 = vld [vmem:[#allocation3 + $0xb70] sm:$0x3f]
    %v461 = vld [vmem:[#allocation3 + $0xb78] sm:$0x3f]
    %v462 = vld [vmem:[#allocation3 + $0xb80] sm:$0x3f]
    %v463 = vld [vmem:[#allocation3 + $0xb88] sm:$0x3f]
    %v464 = vld [vmem:[#allocation3 + $0xb90] sm:$0x3f]
    %v465 = vld [vmem:[#allocation3 + $0xb98] sm:$0x3f]
    %v466 = vld [vmem:[#allocation3 + $0xba0] sm:$0x3f]
    %v467 = vld [vmem:[#allocation3 + $0xba8] sm:$0x3f]
    %v468 = vld [vmem:[#allocation3 + $0xbb0] sm:$0x3f]
    %v469 = vld [vmem:[#allocation3 + $0xbb8] sm:$0x3f]
    %v470 = vld [vmem:[#allocation3 + $0xbc0] sm:$0x3f]
    %v471 = vld [vmem:[#allocation3 + $0xbc8] sm:$0x3f]
    %v472 = vld [vmem:[#allocation3 + $0xbd0] sm:$0x3f]
    %v473 = vld [vmem:[#allocation3 + $0xbd8] sm:$0x3f]
    %v474 = vld [vmem:[#allocation3 + $0xbe0] sm:$0x3f]
    %v475 = vld [vmem:[#allocation3 + $0xbe8] sm:$0x3f]
    %v476 = vld [vmem:[#allocation3 + $0xbf0] sm:$0x3f]
    %v477 = vld [vmem:[#allocation3 + $0xbf8] sm:$0x3f]
    %v478 = vld [vmem:[#allocation2] sm:$0x3]
    %503 = vst [vmem:[#allocation1] ss:$4 sm:$0xff] %v70
    %s504 = scalar_lea.vmem [#allocation1], 32
    %505 = vst [vmem:[%s504] ss:$4 sm:$0xff] %v71
    %v506 = vld.sshfl [vmem:[#allocation1] sm:$0xff pattern:$0x73625140]
    %v507 = vld.sshfl [vmem:[#allocation1 + $0x8] sm:$0xff pattern:$0x73625140]
    %v508 = vld.sshfl [vmem:[#allocation1 + $0x10] sm:$0xff pattern:$0x73625140]
    %v509 = vld.sshfl [vmem:[#allocation1 + $0x18] sm:$0xff pattern:$0x73625140]
    %v510 = vld.sshfl [vmem:[#allocation1 + $0x20] sm:$0xff pattern:$0x73625140]
    %v511 = vld.sshfl [vmem:[#allocation1 + $0x28] sm:$0xff pattern:$0x73625140]
    %v512 = vld.sshfl [vmem:[#allocation1 + $0x30] sm:$0xff pattern:$0x73625140]
    %v513 = vld.sshfl [vmem:[#allocation1 + $0x38] sm:$0xff pattern:$0x73625140]
    %514 = vst [vmem:[#allocation1] ss:$4 sm:$0xff] %v72
    %515 = vst [vmem:[%s504] ss:$4 sm:$0xff] %v73
    %v516 = vld.sshfl [vmem:[#allocation1] sm:$0xff pattern:$0x73625140]
    %v517 = vld.sshfl [vmem:[#allocation1 + $0x8] sm:$0xff pattern:$0x73625140]
    %v518 = vld.sshfl [vmem:[#allocation1 + $0x10] sm:$0xff pattern:$0x73625140]
    %v519 = vld.sshfl [vmem:[#allocation1 + $0x18] sm:$0xff pattern:$0x73625140]
    %v520 = vld.sshfl [vmem:[#allocation1 + $0x20] sm:$0xff pattern:$0x73625140]
    %v521 = vld.sshfl [vmem:[#allocation1 + $0x28] sm:$0xff pattern:$0x73625140]
    %v522 = vld.sshfl [vmem:[#allocation1 + $0x30] sm:$0xff pattern:$0x73625140]
    %v523 = vld.sshfl [vmem:[#allocation1 + $0x38] sm:$0xff pattern:$0x73625140]
    %524 = vst [vmem:[#allocation1] ss:$4 sm:$0xff] %v74
    %525 = vst [vmem:[%s504] ss:$4 sm:$0xff] %v75
    %v526 = vld.sshfl [vmem:[#allocation1] sm:$0xff pattern:$0x73625140]
    %v527 = vld.sshfl [vmem:[#allocation1 + $0x8] sm:$0xff pattern:$0x73625140]
    %v528 = vld.sshfl [vmem:[#allocation1 + $0x10] sm:$0xff pattern:$0x73625140]
    %v529 = vld.sshfl [vmem:[#allocation1 + $0x18] sm:$0xff pattern:$0x73625140]
    %v530 = vld.sshfl [vmem:[#allocation1 + $0x20] sm:$0xff pattern:$0x73625140]
    %v531 = vld.sshfl [vmem:[#allocation1 + $0x28] sm:$0xff pattern:$0x73625140]
    %v532 = vld.sshfl [vmem:[#allocation1 + $0x30] sm:$0xff pattern:$0x73625140]
    %v533 = vld.sshfl [vmem:[#allocation1 + $0x38] sm:$0xff pattern:$0x73625140]
    %534 = vst [vmem:[#allocation1] ss:$4 sm:$0xff] %v76
    %535 = vst [vmem:[%s504] ss:$4 sm:$0xff] %v77
    %v536 = vld.sshfl [vmem:[#allocation1] sm:$0xff pattern:$0x73625140]
    %v537 = vld.sshfl [vmem:[#allocation1 + $0x8] sm:$0xff pattern:$0x73625140]
    %v538 = vld.sshfl [vmem:[#allocation1 + $0x10] sm:$0xff pattern:$0x73625140]
    %v539 = vld.sshfl [vmem:[#allocation1 + $0x18] sm:$0xff pattern:$0x73625140]
    %v540 = vld.sshfl [vmem:[#allocation1 + $0x20] sm:$0xff pattern:$0x73625140]
    %v541 = vld.sshfl [vmem:[#allocation1 + $0x28] sm:$0xff pattern:$0x73625140]
    %v542 = vld.sshfl [vmem:[#allocation1 + $0x30] sm:$0xff pattern:$0x73625140]
    %v543 = vld.sshfl [vmem:[#allocation1 + $0x38] sm:$0xff pattern:$0x73625140]
    %544 = vst [vmem:[#allocation1] ss:$4 sm:$0xff] %v78
    %545 = vst [vmem:[%s504] ss:$4 sm:$0xff] %v79
    %v546 = vld.sshfl [vmem:[#allocation1] sm:$0xff pattern:$0x73625140]
    %v547 = vld.sshfl [vmem:[#allocation1 + $0x8] sm:$0xff pattern:$0x73625140]
    %v548 = vld.sshfl [vmem:[#allocation1 + $0x10] sm:$0xff pattern:$0x73625140]
    %v549 = vld.sshfl [vmem:[#allocation1 + $0x18] sm:$0xff pattern:$0x73625140]
    %v550 = vld.sshfl [vmem:[#allocation1 + $0x20] sm:$0xff pattern:$0x73625140]
    %v551 = vld.sshfl [vmem:[#allocation1 + $0x28] sm:$0xff pattern:$0x73625140]
    %v552 = vld.sshfl [vmem:[#allocation1 + $0x30] sm:$0xff pattern:$0x73625140]
    %v553 = vld.sshfl [vmem:[#allocation1 + $0x38] sm:$0xff pattern:$0x73625140]
    %554 = vst [vmem:[#allocation1] ss:$4 sm:$0xff] %v80
    %555 = vst [vmem:[%s504] ss:$4 sm:$0xff] %v81
    %v556 = vld.sshfl [vmem:[#allocation1] sm:$0xff pattern:$0x73625140]
    %v557 = vld.sshfl [vmem:[#allocation1 + $0x8] sm:$0xff pattern:$0x73625140]
    %v558 = vld.sshfl [vmem:[#allocation1 + $0x10] sm:$0xff pattern:$0x73625140]
    %v559 = vld.sshfl [vmem:[#allocation1 + $0x18] sm:$0xff pattern:$0x73625140]
    %v560 = vld.sshfl [vmem:[#allocation1 + $0x20] sm:$0xff pattern:$0x73625140]
    %v561 = vld.sshfl [vmem:[#allocation1 + $0x28] sm:$0xff pattern:$0x73625140]
    %v562 = vld.sshfl [vmem:[#allocation1 + $0x30] sm:$0xff pattern:$0x73625140]
    %v563 = vld.sshfl [vmem:[#allocation1 + $0x38] sm:$0xff pattern:$0x73625140]
    %564 = vst [vmem:[#allocation1] ss:$4 sm:$0xff] %v82
    %565 = vst [vmem:[%s504] ss:$4 sm:$0xff] %v83
    %v566 = vld.sshfl [vmem:[#allocation1] sm:$0xff pattern:$0x73625140]
    %v567 = vld.sshfl [vmem:[#allocation1 + $0x8] sm:$0xff pattern:$0x73625140]
    %v568 = vld.sshfl [vmem:[#allocation1 + $0x10] sm:$0xff pattern:$0x73625140]
    %v569 = vld.sshfl [vmem:[#allocation1 + $0x18] sm:$0xff pattern:$0x73625140]
    %v570 = vld.sshfl [vmem:[#allocation1 + $0x20] sm:$0xff pattern:$0x73625140]
    %v571 = vld.sshfl [vmem:[#allocation1 + $0x28] sm:$0xff pattern:$0x73625140]
    %v572 = vld.sshfl [vmem:[#allocation1 + $0x30] sm:$0xff pattern:$0x73625140]
    %v573 = vld.sshfl [vmem:[#allocation1 + $0x38] sm:$0xff pattern:$0x73625140]
    %574 = vst [vmem:[#allocation1] ss:$4 sm:$0xff] %v84
    %575 = vst [vmem:[%s504] ss:$4 sm:$0xff] %v85
    %v576 = vld.sshfl [vmem:[#allocation1] sm:$0xff pattern:$0x73625140]
    %v577 = vld.sshfl [vmem:[#allocation1 + $0x8] sm:$0xff pattern:$0x73625140]
    %v578 = vld.sshfl [vmem:[#allocation1 + $0x10] sm:$0xff pattern:$0x73625140]
    %v579 = vld.sshfl [vmem:[#allocation1 + $0x18] sm:$0xff pattern:$0x73625140]
    %v580 = vld.sshfl [vmem:[#allocation1 + $0x20] sm:$0xff pattern:$0x73625140]
    %v581 = vld.sshfl [vmem:[#allocation1 + $0x28] sm:$0xff pattern:$0x73625140]
    %v582 = vld.sshfl [vmem:[#allocation1 + $0x30] sm:$0xff pattern:$0x73625140]
    %v583 = vld.sshfl [vmem:[#allocation1 + $0x38] sm:$0xff pattern:$0x73625140]
    %584 = vst [vmem:[#allocation1] ss:$4 sm:$0xff] %v86
    %585 = vst [vmem:[%s504] ss:$4 sm:$0xff] %v87
    %v586 = vld.sshfl [vmem:[#allocation1] sm:$0xff pattern:$0x73625140]
    %v587 = vld.sshfl [vmem:[#allocation1 + $0x8] sm:$0xff pattern:$0x73625140]
    %v588 = vld.sshfl [vmem:[#allocation1 + $0x10] sm:$0xff pattern:$0x73625140]
    %v589 = vld.sshfl [vmem:[#allocation1 + $0x18] sm:$0xff pattern:$0x73625140]
    %v590 = vld.sshfl [vmem:[#allocation1 + $0x20] sm:$0xff pattern:$0x73625140]
    %v591 = vld.sshfl [vmem:[#allocation1 + $0x28] sm:$0xff pattern:$0x73625140]
    %v592 = vld.sshfl [vmem:[#allocation1 + $0x30] sm:$0xff pattern:$0x73625140]
    %v593 = vld.sshfl [vmem:[#allocation1 + $0x38] sm:$0xff pattern:$0x73625140]
    %594 = vst [vmem:[#allocation1] ss:$4 sm:$0xff] %v88
    %595 = vst [vmem:[%s504] ss:$4 sm:$0xff] %v89
    %v596 = vld.sshfl [vmem:[#allocation1] sm:$0xff pattern:$0x73625140]
    %v597 = vld.sshfl [vmem:[#allocation1 + $0x8] sm:$0xff pattern:$0x73625140]
    %v598 = vld.sshfl [vmem:[#allocation1 + $0x10] sm:$0xff pattern:$0x73625140]
    %v599 = vld.sshfl [vmem:[#allocation1 + $0x18] sm:$0xff pattern:$0x73625140]
    %v600 = vld.sshfl [vmem:[#allocation1 + $0x20] sm:$0xff pattern:$0x73625140]
    %v601 = vld.sshfl [vmem:[#allocation1 + $0x28] sm:$0xff pattern:$0x73625140]
    %v602 = vld.sshfl [vmem:[#allocation1 + $0x30] sm:$0xff pattern:$0x73625140]
    %v603 = vld.sshfl [vmem:[#allocation1 + $0x38] sm:$0xff pattern:$0x73625140]
    %604 = vst [vmem:[#allocation1] ss:$4 sm:$0xff] %v90
    %605 = vst [vmem:[%s504] ss:$4 sm:$0xff] %v91
    %v606 = vld.sshfl [vmem:[#allocation1] sm:$0xff pattern:$0x73625140]
    %v607 = vld.sshfl [vmem:[#allocation1 + $0x8] sm:$0xff pattern:$0x73625140]
    %v608 = vld.sshfl [vmem:[#allocation1 + $0x10] sm:$0xff pattern:$0x73625140]
    %v609 = vld.sshfl [vmem:[#allocation1 + $0x18] sm:$0xff pattern:$0x73625140]
    %v610 = vld.sshfl [vmem:[#allocation1 + $0x20] sm:$0xff pattern:$0x73625140]
    %v611 = vld.sshfl [vmem:[#allocation1 + $0x28] sm:$0xff pattern:$0x73625140]
    %v612 = vld.sshfl [vmem:[#allocation1 + $0x30] sm:$0xff pattern:$0x73625140]
    %v613 = vld.sshfl [vmem:[#allocation1 + $0x38] sm:$0xff pattern:$0x73625140]
    %614 = vst [vmem:[#allocation1] ss:$4 sm:$0xff] %v92
    %615 = vst [vmem:[%s504] ss:$4 sm:$0xff] %v93
    %v616 = vld.sshfl [vmem:[#allocation1] sm:$0xff pattern:$0x73625140]
    %v617 = vld.sshfl [vmem:[#allocation1 + $0x8] sm:$0xff pattern:$0x73625140]
    %v618 = vld.sshfl [vmem:[#allocation1 + $0x10] sm:$0xff pattern:$0x73625140]
    %v619 = vld.sshfl [vmem:[#allocation1 + $0x18] sm:$0xff pattern:$0x73625140]
    %v620 = vld.sshfl [vmem:[#allocation1 + $0x20] sm:$0xff pattern:$0x73625140]
    %v621 = vld.sshfl [vmem:[#allocation1 + $0x28] sm:$0xff pattern:$0x73625140]
    %v622 = vld.sshfl [vmem:[#allocation1 + $0x30] sm:$0xff pattern:$0x73625140]
    %v623 = vld.sshfl [vmem:[#allocation1 + $0x38] sm:$0xff pattern:$0x73625140]
    %720 = vmatpush.xpose.msra.mxu0 0.0
    %721 = vmatpush.xpose.msra.mxu0 0.0
    %722 = vmatpush.xpose.msra.mxu0 0.0
    %723 = vmatpush.xpose.msra.mxu0 0.0
    %724 = vmatpush.xpose.msra.mxu0 0.0
    %725 = vmatpush.xpose.msra.mxu0 0.0
    %726 = vmatpush.xpose.msra.mxu0 0.0
    %727 = vmatpush.xpose.msra.mxu0 0.0
    %728 = vmatpush.xpose.msra.mxu0 0.0
    %729 = vmatpush.xpose.msra.mxu0 0.0
    %730 = vmatpush.xpose.msra.mxu0 0.0
    %731 = vmatpush.xpose.msra.mxu0 0.0
    %732 = vmatpush.xpose.msra.mxu0 %v382
    %733 = vmatpush.xpose.msra.mxu0 %v286
    %734 = vmatpush.xpose.msra.mxu0 %v190
    %735 = vmatpush.xpose.msra.mxu0 %v94
    %736 = vmatmul.f32.gmra.mxu0 %v506
    %v737 = vpop.f32.mrf.mxu0
    %v738 = vadd.f32 0.0, %v737
    %739 = vdwg.mxu0
    %740 = vmatpush.xpose.msra.mxu0 0.0
    %741 = vmatpush.xpose.msra.mxu0 0.0
    %742 = vmatpush.xpose.msra.mxu0 0.0
    %743 = vmatpush.xpose.msra.mxu0 0.0
    %744 = vmatpush.xpose.msra.mxu0 0.0
    %745 = vmatpush.xpose.msra.mxu0 0.0
    %746 = vmatpush.xpose.msra.mxu0 0.0
    %747 = vmatpush.xpose.msra.mxu0 0.0
    %748 = vmatpush.xpose.msra.mxu0 0.0
    %749 = vmatpush.xpose.msra.mxu0 0.0
    %750 = vmatpush.xpose.msra.mxu0 0.0
    %751 = vmatpush.xpose.msra.mxu0 0.0
    %752 = vmatpush.xpose.msra.mxu0 %v383
    %753 = vmatpush.xpose.msra.mxu0 %v287
    %754 = vmatpush.xpose.msra.mxu0 %v191
    %755 = vmatpush.xpose.msra.mxu0 %v95
    %756 = vmatmul.f32.gmra.mxu0 %v507
    %v757 = vpop.f32.mrf.mxu0
    %v758 = vadd.f32 %v738, %v757
    %759 = vdwg.mxu0
    %760 = vmatpush.xpose.msra.mxu0 0.0
    %761 = vmatpush.xpose.msra.mxu0 0.0
    %762 = vmatpush.xpose.msra.mxu0 0.0
    %763 = vmatpush.xpose.msra.mxu0 0.0
    %764 = vmatpush.xpose.msra.mxu0 0.0
    %765 = vmatpush.xpose.msra.mxu0 0.0
    %766 = vmatpush.xpose.msra.mxu0 0.0
    %767 = vmatpush.xpose.msra.mxu0 0.0
    %768 = vmatpush.xpose.msra.mxu0 0.0
    %769 = vmatpush.xpose.msra.mxu0 0.0
    %770 = vmatpush.xpose.msra.mxu0 0.0
    %771 = vmatpush.xpose.msra.mxu0 0.0
    %772 = vmatpush.xpose.msra.mxu0 %v384
    %773 = vmatpush.xpose.msra.mxu0 %v288
    %774 = vmatpush.xpose.msra.mxu0 %v192
    %775 = vmatpush.xpose.msra.mxu0 %v96
    %776 = vmatmul.f32.gmra.mxu0 %v508
    %v777 = vpop.f32.mrf.mxu0
    %v778 = vadd.f32 %v758, %v777
    %779 = vdwg.mxu0
    %780 = vmatpush.xpose.msra.mxu0 0.0
    %781 = vmatpush.xpose.msra.mxu0 0.0
    %782 = vmatpush.xpose.msra.mxu0 0.0
    %783 = vmatpush.xpose.msra.mxu0 0.0
    %784 = vmatpush.xpose.msra.mxu0 0.0
    %785 = vmatpush.xpose.msra.mxu0 0.0
    %786 = vmatpush.xpose.msra.mxu0 0.0
    %787 = vmatpush.xpose.msra.mxu0 0.0
    %788 = vmatpush.xpose.msra.mxu0 0.0
    %789 = vmatpush.xpose.msra.mxu0 0.0
    %790 = vmatpush.xpose.msra.mxu0 0.0
    %791 = vmatpush.xpose.msra.mxu0 0.0
    %792 = vmatpush.xpose.msra.mxu0 %v385
    %793 = vmatpush.xpose.msra.mxu0 %v289
    %794 = vmatpush.xpose.msra.mxu0 %v193
    %795 = vmatpush.xpose.msra.mxu0 %v97
    %796 = vmatmul.f32.gmra.mxu0 %v509
    %v797 = vpop.f32.mrf.mxu0
    %v798 = vadd.f32 %v778, %v797
    %799 = vdwg.mxu0
    %800 = vmatpush.xpose.msra.mxu0 0.0
    %801 = vmatpush.xpose.msra.mxu0 0.0
    %802 = vmatpush.xpose.msra.mxu0 0.0
    %803 = vmatpush.xpose.msra.mxu0 0.0
    %804 = vmatpush.xpose.msra.mxu0 0.0
    %805 = vmatpush.xpose.msra.mxu0 0.0
    %806 = vmatpush.xpose.msra.mxu0 0.0
    %807 = vmatpush.xpose.msra.mxu0 0.0
    %808 = vmatpush.xpose.msra.mxu0 0.0
    %809 = vmatpush.xpose.msra.mxu0 0.0
    %810 = vmatpush.xpose.msra.mxu0 0.0
    %811 = vmatpush.xpose.msra.mxu0 0.0
    %812 = vmatpush.xpose.msra.mxu0 %v386
    %813 = vmatpush.xpose.msra.mxu0 %v290
    %814 = vmatpush.xpose.msra.mxu0 %v194
    %815 = vmatpush.xpose.msra.mxu0 %v98
    %816 = vmatmul.f32.gmra.mxu0 %v510
    %v817 = vpop.f32.mrf.mxu0
    %v818 = vadd.f32 %v798, %v817
    %819 = vdwg.mxu0
    %820 = vmatpush.xpose.msra.mxu0 0.0
    %821 = vmatpush.xpose.msra.mxu0 0.0
    %822 = vmatpush.xpose.msra.mxu0 0.0
    %823 = vmatpush.xpose.msra.mxu0 0.0
    %824 = vmatpush.xpose.msra.mxu0 0.0
    %825 = vmatpush.xpose.msra.mxu0 0.0
    %826 = vmatpush.xpose.msra.mxu0 0.0
    %827 = vmatpush.xpose.msra.mxu0 0.0
    %828 = vmatpush.xpose.msra.mxu0 0.0
    %829 = vmatpush.xpose.msra.mxu0 0.0
    %830 = vmatpush.xpose.msra.mxu0 0.0
    %831 = vmatpush.xpose.msra.mxu0 0.0
    %832 = vmatpush.xpose.msra.mxu0 %v387
    %833 = vmatpush.xpose.msra.mxu0 %v291
    %834 = vmatpush.xpose.msra.mxu0 %v195
    %835 = vmatpush.xpose.msra.mxu0 %v99
    %836 = vmatmul.f32.gmra.mxu0 %v511
    %v837 = vpop.f32.mrf.mxu0
    %v838 = vadd.f32 %v818, %v837
    %839 = vdwg.mxu0
    %840 = vmatpush.xpose.msra.mxu0 0.0
    %841 = vmatpush.xpose.msra.mxu0 0.0
    %842 = vmatpush.xpose.msra.mxu0 0.0
    %843 = vmatpush.xpose.msra.mxu0 0.0
    %844 = vmatpush.xpose.msra.mxu0 0.0
    %845 = vmatpush.xpose.msra.mxu0 0.0
    %846 = vmatpush.xpose.msra.mxu0 0.0
    %847 = vmatpush.xpose.msra.mxu0 0.0
    %848 = vmatpush.xpose.msra.mxu0 0.0
    %849 = vmatpush.xpose.msra.mxu0 0.0
    %850 = vmatpush.xpose.msra.mxu0 0.0
    %851 = vmatpush.xpose.msra.mxu0 0.0
    %852 = vmatpush.xpose.msra.mxu0 %v388
    %853 = vmatpush.xpose.msra.mxu0 %v292
    %854 = vmatpush.xpose.msra.mxu0 %v196
    %855 = vmatpush.xpose.msra.mxu0 %v100
    %856 = vmatmul.f32.gmra.mxu0 %v512
    %v857 = vpop.f32.mrf.mxu0
    %v858 = vadd.f32 %v838, %v857
    %859 = vdwg.mxu0
    %860 = vmatpush.xpose.msra.mxu0 0.0
    %861 = vmatpush.xpose.msra.mxu0 0.0
    %862 = vmatpush.xpose.msra.mxu0 0.0
    %863 = vmatpush.xpose.msra.mxu0 0.0
    %864 = vmatpush.xpose.msra.mxu0 0.0
    %865 = vmatpush.xpose.msra.mxu0 0.0
    %866 = vmatpush.xpose.msra.mxu0 0.0
    %867 = vmatpush.xpose.msra.mxu0 0.0
    %868 = vmatpush.xpose.msra.mxu0 0.0
    %869 = vmatpush.xpose.msra.mxu0 0.0
    %870 = vmatpush.xpose.msra.mxu0 0.0
    %871 = vmatpush.xpose.msra.mxu0 0.0
    %872 = vmatpush.xpose.msra.mxu0 %v389
    %873 = vmatpush.xpose.msra.mxu0 %v293
    %874 = vmatpush.xpose.msra.mxu0 %v197
    %875 = vmatpush.xpose.msra.mxu0 %v101
    %876 = vmatmul.f32.gmra.mxu0 %v513
    %v877 = vpop.f32.mrf.mxu0
    %v878 = vadd.f32 %v858, %v877
    %879 = vdwg.mxu0
    %880 = vmatpush.xpose.msra.mxu0 0.0
    %881 = vmatpush.xpose.msra.mxu0 0.0
    %882 = vmatpush.xpose.msra.mxu0 0.0
    %883 = vmatpush.xpose.msra.mxu0 0.0
    %884 = vmatpush.xpose.msra.mxu0 0.0
    %885 = vmatpush.xpose.msra.mxu0 0.0
    %886 = vmatpush.xpose.msra.mxu0 0.0
    %887 = vmatpush.xpose.msra.mxu0 0.0
    %888 = vmatpush.xpose.msra.mxu0 0.0
    %889 = vmatpush.xpose.msra.mxu0 0.0
    %890 = vmatpush.xpose.msra.mxu0 0.0
    %891 = vmatpush.xpose.msra.mxu0 0.0
    %892 = vmatpush.xpose.msra.mxu0 %v390
    %893 = vmatpush.xpose.msra.mxu0 %v294
    %894 = vmatpush.xpose.msra.mxu0 %v198
    %895 = vmatpush.xpose.msra.mxu0 %v102
    %896 = vmatmul.f32.gmra.mxu0 %v516
    %v897 = vpop.f32.mrf.mxu0
    %v898 = vadd.f32 %v878, %v897
    %899 = vdwg.mxu0
    %900 = vmatpush.xpose.msra.mxu0 0.0
    %901 = vmatpush.xpose.msra.mxu0 0.0
    %902 = vmatpush.xpose.msra.mxu0 0.0
    %903 = vmatpush.xpose.msra.mxu0 0.0
    %904 = vmatpush.xpose.msra.mxu0 0.0
    %905 = vmatpush.xpose.msra.mxu0 0.0
    %906 = vmatpush.xpose.msra.mxu0 0.0
    %907 = vmatpush.xpose.msra.mxu0 0.0
    %908 = vmatpush.xpose.msra.mxu0 0.0
    %909 = vmatpush.xpose.msra.mxu0 0.0
    %910 = vmatpush.xpose.msra.mxu0 0.0
    %911 = vmatpush.xpose.msra.mxu0 0.0
    %912 = vmatpush.xpose.msra.mxu0 %v391
    %913 = vmatpush.xpose.msra.mxu0 %v295
    %914 = vmatpush.xpose.msra.mxu0 %v199
    %915 = vmatpush.xpose.msra.mxu0 %v103
    %916 = vmatmul.f32.gmra.mxu0 %v517
    %v917 = vpop.f32.mrf.mxu0
    %v918 = vadd.f32 %v898, %v917
    %919 = vdwg.mxu0
    %920 = vmatpush.xpose.msra.mxu0 0.0
    %921 = vmatpush.xpose.msra.mxu0 0.0
    %922 = vmatpush.xpose.msra.mxu0 0.0
    %923 = vmatpush.xpose.msra.mxu0 0.0
    %924 = vmatpush.xpose.msra.mxu0 0.0
    %925 = vmatpush.xpose.msra.mxu0 0.0
    %926 = vmatpush.xpose.msra.mxu0 0.0
    %927 = vmatpush.xpose.msra.mxu0 0.0
    %928 = vmatpush.xpose.msra.mxu0 0.0
    %929 = vmatpush.xpose.msra.mxu0 0.0
    %930 = vmatpush.xpose.msra.mxu0 0.0
    %931 = vmatpush.xpose.msra.mxu0 0.0
    %932 = vmatpush.xpose.msra.mxu0 %v392
    %933 = vmatpush.xpose.msra.mxu0 %v296
    %934 = vmatpush.xpose.msra.mxu0 %v200
    %935 = vmatpush.xpose.msra.mxu0 %v104
    %936 = vmatmul.f32.gmra.mxu0 %v518
    %v937 = vpop.f32.mrf.mxu0
    %v938 = vadd.f32 %v918, %v937
    %939 = vdwg.mxu0
    %940 = vmatpush.xpose.msra.mxu0 0.0
    %941 = vmatpush.xpose.msra.mxu0 0.0
    %942 = vmatpush.xpose.msra.mxu0 0.0
    %943 = vmatpush.xpose.msra.mxu0 0.0
    %944 = vmatpush.xpose.msra.mxu0 0.0
    %945 = vmatpush.xpose.msra.mxu0 0.0
    %946 = vmatpush.xpose.msra.mxu0 0.0
    %947 = vmatpush.xpose.msra.mxu0 0.0
    %948 = vmatpush.xpose.msra.mxu0 0.0
    %949 = vmatpush.xpose.msra.mxu0 0.0
    %950 = vmatpush.xpose.msra.mxu0 0.0
    %951 = vmatpush.xpose.msra.mxu0 0.0
    %952 = vmatpush.xpose.msra.mxu0 %v393
    %953 = vmatpush.xpose.msra.mxu0 %v297
    %954 = vmatpush.xpose.msra.mxu0 %v201
    %955 = vmatpush.xpose.msra.mxu0 %v105
    %956 = vmatmul.f32.gmra.mxu0 %v519
    %v957 = vpop.f32.mrf.mxu0
    %v958 = vadd.f32 %v938, %v957
    %959 = vdwg.mxu0
    %960 = vmatpush.xpose.msra.mxu0 0.0
    %961 = vmatpush.xpose.msra.mxu0 0.0
    %962 = vmatpush.xpose.msra.mxu0 0.0
    %963 = vmatpush.xpose.msra.mxu0 0.0
    %964 = vmatpush.xpose.msra.mxu0 0.0
    %965 = vmatpush.xpose.msra.mxu0 0.0
    %966 = vmatpush.xpose.msra.mxu0 0.0
    %967 = vmatpush.xpose.msra.mxu0 0.0
    %968 = vmatpush.xpose.msra.mxu0 0.0
    %969 = vmatpush.xpose.msra.mxu0 0.0
    %970 = vmatpush.xpose.msra.mxu0 0.0
    %971 = vmatpush.xpose.msra.mxu0 0.0
    %972 = vmatpush.xpose.msra.mxu0 %v394
    %973 = vmatpush.xpose.msra.mxu0 %v298
    %974 = vmatpush.xpose.msra.mxu0 %v202
    %975 = vmatpush.xpose.msra.mxu0 %v106
    %976 = vmatmul.f32.gmra.mxu0 %v520
    %v977 = vpop.f32.mrf.mxu0
    %v978 = vadd.f32 %v958, %v977
    %979 = vdwg.mxu0
    %980 = vmatpush.xpose.msra.mxu0 0.0
    %981 = vmatpush.xpose.msra.mxu0 0.0
    %982 = vmatpush.xpose.msra.mxu0 0.0
    %983 = vmatpush.xpose.msra.mxu0 0.0
    %984 = vmatpush.xpose.msra.mxu0 0.0
    %985 = vmatpush.xpose.msra.mxu0 0.0
    %986 = vmatpush.xpose.msra.mxu0 0.0
    %987 = vmatpush.xpose.msra.mxu0 0.0
    %988 = vmatpush.xpose.msra.mxu0 0.0
    %989 = vmatpush.xpose.msra.mxu0 0.0
    %990 = vmatpush.xpose.msra.mxu0 0.0
    %991 = vmatpush.xpose.msra.mxu0 0.0
    %992 = vmatpush.xpose.msra.mxu0 %v395
    %993 = vmatpush.xpose.msra.mxu0 %v299
    %994 = vmatpush.xpose.msra.mxu0 %v203
    %995 = vmatpush.xpose.msra.mxu0 %v107
    %996 = vmatmul.f32.gmra.mxu0 %v521
    %v997 = vpop.f32.mrf.mxu0
    %v998 = vadd.f32 %v978, %v997
    %999 = vdwg.mxu0
    %1000 = vmatpush.xpose.msra.mxu0 0.0
    %1001 = vmatpush.xpose.msra.mxu0 0.0
    %1002 = vmatpush.xpose.msra.mxu0 0.0
    %1003 = vmatpush.xpose.msra.mxu0 0.0
    %1004 = vmatpush.xpose.msra.mxu0 0.0
    %1005 = vmatpush.xpose.msra.mxu0 0.0
    %1006 = vmatpush.xpose.msra.mxu0 0.0
    %1007 = vmatpush.xpose.msra.mxu0 0.0
    %1008 = vmatpush.xpose.msra.mxu0 0.0
    %1009 = vmatpush.xpose.msra.mxu0 0.0
    %1010 = vmatpush.xpose.msra.mxu0 0.0
    %1011 = vmatpush.xpose.msra.mxu0 0.0
    %1012 = vmatpush.xpose.msra.mxu0 %v396
    %1013 = vmatpush.xpose.msra.mxu0 %v300
    %1014 = vmatpush.xpose.msra.mxu0 %v204
    %1015 = vmatpush.xpose.msra.mxu0 %v108
    %1016 = vmatmul.f32.gmra.mxu0 %v522
    %v1017 = vpop.f32.mrf.mxu0
    %v1018 = vadd.f32 %v998, %v1017
    %1019 = vdwg.mxu0
    %1020 = vmatpush.xpose.msra.mxu0 0.0
    %1021 = vmatpush.xpose.msra.mxu0 0.0
    %1022 = vmatpush.xpose.msra.mxu0 0.0
    %1023 = vmatpush.xpose.msra.mxu0 0.0
    %1024 = vmatpush.xpose.msra.mxu0 0.0
    %1025 = vmatpush.xpose.msra.mxu0 0.0
    %1026 = vmatpush.xpose.msra.mxu0 0.0
    %1027 = vmatpush.xpose.msra.mxu0 0.0
    %1028 = vmatpush.xpose.msra.mxu0 0.0
    %1029 = vmatpush.xpose.msra.mxu0 0.0
    %1030 = vmatpush.xpose.msra.mxu0 0.0
    %1031 = vmatpush.xpose.msra.mxu0 0.0
    %1032 = vmatpush.xpose.msra.mxu0 %v397
    %1033 = vmatpush.xpose.msra.mxu0 %v301
    %1034 = vmatpush.xpose.msra.mxu0 %v205
    %1035 = vmatpush.xpose.msra.mxu0 %v109
    %1036 = vmatmul.f32.gmra.mxu0 %v523
    %v1037 = vpop.f32.mrf.mxu0
    %v1038 = vadd.f32 %v1018, %v1037
    %1039 = vdwg.mxu0
    %1040 = vmatpush.xpose.msra.mxu0 0.0
    %1041 = vmatpush.xpose.msra.mxu0 0.0
    %1042 = vmatpush.xpose.msra.mxu0 0.0
    %1043 = vmatpush.xpose.msra.mxu0 0.0
    %1044 = vmatpush.xpose.msra.mxu0 0.0
    %1045 = vmatpush.xpose.msra.mxu0 0.0
    %1046 = vmatpush.xpose.msra.mxu0 0.0
    %1047 = vmatpush.xpose.msra.mxu0 0.0
    %1048 = vmatpush.xpose.msra.mxu0 0.0
    %1049 = vmatpush.xpose.msra.mxu0 0.0
    %1050 = vmatpush.xpose.msra.mxu0 0.0
    %1051 = vmatpush.xpose.msra.mxu0 0.0
    %1052 = vmatpush.xpose.msra.mxu0 %v398
    %1053 = vmatpush.xpose.msra.mxu0 %v302
    %1054 = vmatpush.xpose.msra.mxu0 %v206
    %1055 = vmatpush.xpose.msra.mxu0 %v110
    %1056 = vmatmul.f32.gmra.mxu0 %v526
    %v1057 = vpop.f32.mrf.mxu0
    %v1058 = vadd.f32 %v1038, %v1057
    %1059 = vdwg.mxu0
    %1060 = vmatpush.xpose.msra.mxu0 0.0
    %1061 = vmatpush.xpose.msra.mxu0 0.0
    %1062 = vmatpush.xpose.msra.mxu0 0.0
    %1063 = vmatpush.xpose.msra.mxu0 0.0
    %1064 = vmatpush.xpose.msra.mxu0 0.0
    %1065 = vmatpush.xpose.msra.mxu0 0.0
    %1066 = vmatpush.xpose.msra.mxu0 0.0
    %1067 = vmatpush.xpose.msra.mxu0 0.0
    %1068 = vmatpush.xpose.msra.mxu0 0.0
    %1069 = vmatpush.xpose.msra.mxu0 0.0
    %1070 = vmatpush.xpose.msra.mxu0 0.0
    %1071 = vmatpush.xpose.msra.mxu0 0.0
    %1072 = vmatpush.xpose.msra.mxu0 %v399
    %1073 = vmatpush.xpose.msra.mxu0 %v303
    %1074 = vmatpush.xpose.msra.mxu0 %v207
    %1075 = vmatpush.xpose.msra.mxu0 %v111
    %1076 = vmatmul.f32.gmra.mxu0 %v527
    %v1077 = vpop.f32.mrf.mxu0
    %v1078 = vadd.f32 %v1058, %v1077
    %1079 = vdwg.mxu0
    %1080 = vmatpush.xpose.msra.mxu0 0.0
    %1081 = vmatpush.xpose.msra.mxu0 0.0
    %1082 = vmatpush.xpose.msra.mxu0 0.0
    %1083 = vmatpush.xpose.msra.mxu0 0.0
    %1084 = vmatpush.xpose.msra.mxu0 0.0
    %1085 = vmatpush.xpose.msra.mxu0 0.0
    %1086 = vmatpush.xpose.msra.mxu0 0.0
    %1087 = vmatpush.xpose.msra.mxu0 0.0
    %1088 = vmatpush.xpose.msra.mxu0 0.0
    %1089 = vmatpush.xpose.msra.mxu0 0.0
    %1090 = vmatpush.xpose.msra.mxu0 0.0
    %1091 = vmatpush.xpose.msra.mxu0 0.0
    %1092 = vmatpush.xpose.msra.mxu0 %v400
    %1093 = vmatpush.xpose.msra.mxu0 %v304
    %1094 = vmatpush.xpose.msra.mxu0 %v208
    %1095 = vmatpush.xpose.msra.mxu0 %v112
    %1096 = vmatmul.f32.gmra.mxu0 %v528
    %v1097 = vpop.f32.mrf.mxu0
    %v1098 = vadd.f32 %v1078, %v1097
    %1099 = vdwg.mxu0
    %1100 = vmatpush.xpose.msra.mxu0 0.0
    %1101 = vmatpush.xpose.msra.mxu0 0.0
    %1102 = vmatpush.xpose.msra.mxu0 0.0
    %1103 = vmatpush.xpose.msra.mxu0 0.0
    %1104 = vmatpush.xpose.msra.mxu0 0.0
    %1105 = vmatpush.xpose.msra.mxu0 0.0
    %1106 = vmatpush.xpose.msra.mxu0 0.0
    %1107 = vmatpush.xpose.msra.mxu0 0.0
    %1108 = vmatpush.xpose.msra.mxu0 0.0
    %1109 = vmatpush.xpose.msra.mxu0 0.0
    %1110 = vmatpush.xpose.msra.mxu0 0.0
    %1111 = vmatpush.xpose.msra.mxu0 0.0
    %1112 = vmatpush.xpose.msra.mxu0 %v401
    %1113 = vmatpush.xpose.msra.mxu0 %v305
    %1114 = vmatpush.xpose.msra.mxu0 %v209
    %1115 = vmatpush.xpose.msra.mxu0 %v113
    %1116 = vmatmul.f32.gmra.mxu0 %v529
    %v1117 = vpop.f32.mrf.mxu0
    %v1118 = vadd.f32 %v1098, %v1117
    %1119 = vdwg.mxu0
    %1120 = vmatpush.xpose.msra.mxu0 0.0
    %1121 = vmatpush.xpose.msra.mxu0 0.0
    %1122 = vmatpush.xpose.msra.mxu0 0.0
    %1123 = vmatpush.xpose.msra.mxu0 0.0
    %1124 = vmatpush.xpose.msra.mxu0 0.0
    %1125 = vmatpush.xpose.msra.mxu0 0.0
    %1126 = vmatpush.xpose.msra.mxu0 0.0
    %1127 = vmatpush.xpose.msra.mxu0 0.0
    %1128 = vmatpush.xpose.msra.mxu0 0.0
    %1129 = vmatpush.xpose.msra.mxu0 0.0
    %1130 = vmatpush.xpose.msra.mxu0 0.0
    %1131 = vmatpush.xpose.msra.mxu0 0.0
    %1132 = vmatpush.xpose.msra.mxu0 %v402
    %1133 = vmatpush.xpose.msra.mxu0 %v306
    %1134 = vmatpush.xpose.msra.mxu0 %v210
    %1135 = vmatpush.xpose.msra.mxu0 %v114
    %1136 = vmatmul.f32.gmra.mxu0 %v530
    %v1137 = vpop.f32.mrf.mxu0
    %v1138 = vadd.f32 %v1118, %v1137
    %1139 = vdwg.mxu0
    %1140 = vmatpush.xpose.msra.mxu0 0.0
    %1141 = vmatpush.xpose.msra.mxu0 0.0
    %1142 = vmatpush.xpose.msra.mxu0 0.0
    %1143 = vmatpush.xpose.msra.mxu0 0.0
    %1144 = vmatpush.xpose.msra.mxu0 0.0
    %1145 = vmatpush.xpose.msra.mxu0 0.0
    %1146 = vmatpush.xpose.msra.mxu0 0.0
    %1147 = vmatpush.xpose.msra.mxu0 0.0
    %1148 = vmatpush.xpose.msra.mxu0 0.0
    %1149 = vmatpush.xpose.msra.mxu0 0.0
    %1150 = vmatpush.xpose.msra.mxu0 0.0
    %1151 = vmatpush.xpose.msra.mxu0 0.0
    %1152 = vmatpush.xpose.msra.mxu0 %v403
    %1153 = vmatpush.xpose.msra.mxu0 %v307
    %1154 = vmatpush.xpose.msra.mxu0 %v211
    %1155 = vmatpush.xpose.msra.mxu0 %v115
    %1156 = vmatmul.f32.gmra.mxu0 %v531
    %v1157 = vpop.f32.mrf.mxu0
    %v1158 = vadd.f32 %v1138, %v1157
    %1159 = vdwg.mxu0
    %1160 = vmatpush.xpose.msra.mxu0 0.0
    %1161 = vmatpush.xpose.msra.mxu0 0.0
    %1162 = vmatpush.xpose.msra.mxu0 0.0
    %1163 = vmatpush.xpose.msra.mxu0 0.0
    %1164 = vmatpush.xpose.msra.mxu0 0.0
    %1165 = vmatpush.xpose.msra.mxu0 0.0
    %1166 = vmatpush.xpose.msra.mxu0 0.0
    %1167 = vmatpush.xpose.msra.mxu0 0.0
    %1168 = vmatpush.xpose.msra.mxu0 0.0
    %1169 = vmatpush.xpose.msra.mxu0 0.0
    %1170 = vmatpush.xpose.msra.mxu0 0.0
    %1171 = vmatpush.xpose.msra.mxu0 0.0
    %1172 = vmatpush.xpose.msra.mxu0 %v404
    %1173 = vmatpush.xpose.msra.mxu0 %v308
    %1174 = vmatpush.xpose.msra.mxu0 %v212
    %1175 = vmatpush.xpose.msra.mxu0 %v116
    %1176 = vmatmul.f32.gmra.mxu0 %v532
    %v1177 = vpop.f32.mrf.mxu0
    %v1178 = vadd.f32 %v1158, %v1177
    %1179 = vdwg.mxu0
    %1180 = vmatpush.xpose.msra.mxu0 0.0
    %1181 = vmatpush.xpose.msra.mxu0 0.0
    %1182 = vmatpush.xpose.msra.mxu0 0.0
    %1183 = vmatpush.xpose.msra.mxu0 0.0
    %1184 = vmatpush.xpose.msra.mxu0 0.0
    %1185 = vmatpush.xpose.msra.mxu0 0.0
    %1186 = vmatpush.xpose.msra.mxu0 0.0
    %1187 = vmatpush.xpose.msra.mxu0 0.0
    %1188 = vmatpush.xpose.msra.mxu0 0.0
    %1189 = vmatpush.xpose.msra.mxu0 0.0
    %1190 = vmatpush.xpose.msra.mxu0 0.0
    %1191 = vmatpush.xpose.msra.mxu0 0.0
    %1192 = vmatpush.xpose.msra.mxu0 %v405
    %1193 = vmatpush.xpose.msra.mxu0 %v309
    %1194 = vmatpush.xpose.msra.mxu0 %v213
    %1195 = vmatpush.xpose.msra.mxu0 %v117
    %1196 = vmatmul.f32.gmra.mxu0 %v533
    %v1197 = vpop.f32.mrf.mxu0
    %v1198 = vadd.f32 %v1178, %v1197
    %1199 = vdwg.mxu0
    %1200 = vmatpush.xpose.msra.mxu0 0.0
    %1201 = vmatpush.xpose.msra.mxu0 0.0
    %1202 = vmatpush.xpose.msra.mxu0 0.0
    %1203 = vmatpush.xpose.msra.mxu0 0.0
    %1204 = vmatpush.xpose.msra.mxu0 0.0
    %1205 = vmatpush.xpose.msra.mxu0 0.0
    %1206 = vmatpush.xpose.msra.mxu0 0.0
    %1207 = vmatpush.xpose.msra.mxu0 0.0
    %1208 = vmatpush.xpose.msra.mxu0 0.0
    %1209 = vmatpush.xpose.msra.mxu0 0.0
    %1210 = vmatpush.xpose.msra.mxu0 0.0
    %1211 = vmatpush.xpose.msra.mxu0 0.0
    %1212 = vmatpush.xpose.msra.mxu0 %v406
    %1213 = vmatpush.xpose.msra.mxu0 %v310
    %1214 = vmatpush.xpose.msra.mxu0 %v214
    %1215 = vmatpush.xpose.msra.mxu0 %v118
    %1216 = vmatmul.f32.gmra.mxu0 %v536
    %v1217 = vpop.f32.mrf.mxu0
    %v1218 = vadd.f32 %v1198, %v1217
    %1219 = vdwg.mxu0
    %1220 = vmatpush.xpose.msra.mxu0 0.0
    %1221 = vmatpush.xpose.msra.mxu0 0.0
    %1222 = vmatpush.xpose.msra.mxu0 0.0
    %1223 = vmatpush.xpose.msra.mxu0 0.0
    %1224 = vmatpush.xpose.msra.mxu0 0.0
    %1225 = vmatpush.xpose.msra.mxu0 0.0
    %1226 = vmatpush.xpose.msra.mxu0 0.0
    %1227 = vmatpush.xpose.msra.mxu0 0.0
    %1228 = vmatpush.xpose.msra.mxu0 0.0
    %1229 = vmatpush.xpose.msra.mxu0 0.0
    %1230 = vmatpush.xpose.msra.mxu0 0.0
    %1231 = vmatpush.xpose.msra.mxu0 0.0
    %1232 = vmatpush.xpose.msra.mxu0 %v407
    %1233 = vmatpush.xpose.msra.mxu0 %v311
    %1234 = vmatpush.xpose.msra.mxu0 %v215
    %1235 = vmatpush.xpose.msra.mxu0 %v119
    %1236 = vmatmul.f32.gmra.mxu0 %v537
    %v1237 = vpop.f32.mrf.mxu0
    %v1238 = vadd.f32 %v1218, %v1237
    %1239 = vdwg.mxu0
    %1240 = vmatpush.xpose.msra.mxu0 0.0
    %1241 = vmatpush.xpose.msra.mxu0 0.0
    %1242 = vmatpush.xpose.msra.mxu0 0.0
    %1243 = vmatpush.xpose.msra.mxu0 0.0
    %1244 = vmatpush.xpose.msra.mxu0 0.0
    %1245 = vmatpush.xpose.msra.mxu0 0.0
    %1246 = vmatpush.xpose.msra.mxu0 0.0
    %1247 = vmatpush.xpose.msra.mxu0 0.0
    %1248 = vmatpush.xpose.msra.mxu0 0.0
    %1249 = vmatpush.xpose.msra.mxu0 0.0
    %1250 = vmatpush.xpose.msra.mxu0 0.0
    %1251 = vmatpush.xpose.msra.mxu0 0.0
    %1252 = vmatpush.xpose.msra.mxu0 %v408
    %1253 = vmatpush.xpose.msra.mxu0 %v312
    %1254 = vmatpush.xpose.msra.mxu0 %v216
    %1255 = vmatpush.xpose.msra.mxu0 %v120
    %1256 = vmatmul.f32.gmra.mxu0 %v538
    %v1257 = vpop.f32.mrf.mxu0
    %v1258 = vadd.f32 %v1238, %v1257
    %1259 = vdwg.mxu0
    %1260 = vmatpush.xpose.msra.mxu0 0.0
    %1261 = vmatpush.xpose.msra.mxu0 0.0
    %1262 = vmatpush.xpose.msra.mxu0 0.0
    %1263 = vmatpush.xpose.msra.mxu0 0.0
    %1264 = vmatpush.xpose.msra.mxu0 0.0
    %1265 = vmatpush.xpose.msra.mxu0 0.0
    %1266 = vmatpush.xpose.msra.mxu0 0.0
    %1267 = vmatpush.xpose.msra.mxu0 0.0
    %1268 = vmatpush.xpose.msra.mxu0 0.0
    %1269 = vmatpush.xpose.msra.mxu0 0.0
    %1270 = vmatpush.xpose.msra.mxu0 0.0
    %1271 = vmatpush.xpose.msra.mxu0 0.0
    %1272 = vmatpush.xpose.msra.mxu0 %v409
    %1273 = vmatpush.xpose.msra.mxu0 %v313
    %1274 = vmatpush.xpose.msra.mxu0 %v217
    %1275 = vmatpush.xpose.msra.mxu0 %v121
    %1276 = vmatmul.f32.gmra.mxu0 %v539
    %v1277 = vpop.f32.mrf.mxu0
    %v1278 = vadd.f32 %v1258, %v1277
    %1279 = vdwg.mxu0
    %1280 = vmatpush.xpose.msra.mxu0 0.0
    %1281 = vmatpush.xpose.msra.mxu0 0.0
    %1282 = vmatpush.xpose.msra.mxu0 0.0
    %1283 = vmatpush.xpose.msra.mxu0 0.0
    %1284 = vmatpush.xpose.msra.mxu0 0.0
    %1285 = vmatpush.xpose.msra.mxu0 0.0
    %1286 = vmatpush.xpose.msra.mxu0 0.0
    %1287 = vmatpush.xpose.msra.mxu0 0.0
    %1288 = vmatpush.xpose.msra.mxu0 0.0
    %1289 = vmatpush.xpose.msra.mxu0 0.0
    %1290 = vmatpush.xpose.msra.mxu0 0.0
    %1291 = vmatpush.xpose.msra.mxu0 0.0
    %1292 = vmatpush.xpose.msra.mxu0 %v410
    %1293 = vmatpush.xpose.msra.mxu0 %v314
    %1294 = vmatpush.xpose.msra.mxu0 %v218
    %1295 = vmatpush.xpose.msra.mxu0 %v122
    %1296 = vmatmul.f32.gmra.mxu0 %v540
    %v1297 = vpop.f32.mrf.mxu0
    %v1298 = vadd.f32 %v1278, %v1297
    %1299 = vdwg.mxu0
    %1300 = vmatpush.xpose.msra.mxu0 0.0
    %1301 = vmatpush.xpose.msra.mxu0 0.0
    %1302 = vmatpush.xpose.msra.mxu0 0.0
    %1303 = vmatpush.xpose.msra.mxu0 0.0
    %1304 = vmatpush.xpose.msra.mxu0 0.0
    %1305 = vmatpush.xpose.msra.mxu0 0.0
    %1306 = vmatpush.xpose.msra.mxu0 0.0
    %1307 = vmatpush.xpose.msra.mxu0 0.0
    %1308 = vmatpush.xpose.msra.mxu0 0.0
    %1309 = vmatpush.xpose.msra.mxu0 0.0
    %1310 = vmatpush.xpose.msra.mxu0 0.0
    %1311 = vmatpush.xpose.msra.mxu0 0.0
    %1312 = vmatpush.xpose.msra.mxu0 %v411
    %1313 = vmatpush.xpose.msra.mxu0 %v315
    %1314 = vmatpush.xpose.msra.mxu0 %v219
    %1315 = vmatpush.xpose.msra.mxu0 %v123
    %1316 = vmatmul.f32.gmra.mxu0 %v541
    %v1317 = vpop.f32.mrf.mxu0
    %v1318 = vadd.f32 %v1298, %v1317
    %1319 = vdwg.mxu0
    %1320 = vmatpush.xpose.msra.mxu0 0.0
    %1321 = vmatpush.xpose.msra.mxu0 0.0
    %1322 = vmatpush.xpose.msra.mxu0 0.0
    %1323 = vmatpush.xpose.msra.mxu0 0.0
    %1324 = vmatpush.xpose.msra.mxu0 0.0
    %1325 = vmatpush.xpose.msra.mxu0 0.0
    %1326 = vmatpush.xpose.msra.mxu0 0.0
    %1327 = vmatpush.xpose.msra.mxu0 0.0
    %1328 = vmatpush.xpose.msra.mxu0 0.0
    %1329 = vmatpush.xpose.msra.mxu0 0.0
    %1330 = vmatpush.xpose.msra.mxu0 0.0
    %1331 = vmatpush.xpose.msra.mxu0 0.0
    %1332 = vmatpush.xpose.msra.mxu0 %v412
    %1333 = vmatpush.xpose.msra.mxu0 %v316
    %1334 = vmatpush.xpose.msra.mxu0 %v220
    %1335 = vmatpush.xpose.msra.mxu0 %v124
    %1336 = vmatmul.f32.gmra.mxu0 %v542
    %v1337 = vpop.f32.mrf.mxu0
    %v1338 = vadd.f32 %v1318, %v1337
    %1339 = vdwg.mxu0
    %1340 = vmatpush.xpose.msra.mxu0 0.0
    %1341 = vmatpush.xpose.msra.mxu0 0.0
    %1342 = vmatpush.xpose.msra.mxu0 0.0
    %1343 = vmatpush.xpose.msra.mxu0 0.0
    %1344 = vmatpush.xpose.msra.mxu0 0.0
    %1345 = vmatpush.xpose.msra.mxu0 0.0
    %1346 = vmatpush.xpose.msra.mxu0 0.0
    %1347 = vmatpush.xpose.msra.mxu0 0.0
    %1348 = vmatpush.xpose.msra.mxu0 0.0
    %1349 = vmatpush.xpose.msra.mxu0 0.0
    %1350 = vmatpush.xpose.msra.mxu0 0.0
    %1351 = vmatpush.xpose.msra.mxu0 0.0
    %1352 = vmatpush.xpose.msra.mxu0 %v413
    %1353 = vmatpush.xpose.msra.mxu0 %v317
    %1354 = vmatpush.xpose.msra.mxu0 %v221
    %1355 = vmatpush.xpose.msra.mxu0 %v125
    %1356 = vmatmul.f32.gmra.mxu0 %v543
    %v1357 = vpop.f32.mrf.mxu0
    %v1358 = vadd.f32 %v1338, %v1357
    %1359 = vdwg.mxu0
    %1360 = vmatpush.xpose.msra.mxu0 0.0
    %1361 = vmatpush.xpose.msra.mxu0 0.0
    %1362 = vmatpush.xpose.msra.mxu0 0.0
    %1363 = vmatpush.xpose.msra.mxu0 0.0
    %1364 = vmatpush.xpose.msra.mxu0 0.0
    %1365 = vmatpush.xpose.msra.mxu0 0.0
    %1366 = vmatpush.xpose.msra.mxu0 0.0
    %1367 = vmatpush.xpose.msra.mxu0 0.0
    %1368 = vmatpush.xpose.msra.mxu0 0.0
    %1369 = vmatpush.xpose.msra.mxu0 0.0
    %1370 = vmatpush.xpose.msra.mxu0 0.0
    %1371 = vmatpush.xpose.msra.mxu0 0.0
    %1372 = vmatpush.xpose.msra.mxu0 %v414
    %1373 = vmatpush.xpose.msra.mxu0 %v318
    %1374 = vmatpush.xpose.msra.mxu0 %v222
    %1375 = vmatpush.xpose.msra.mxu0 %v126
    %1376 = vmatmul.f32.gmra.mxu0 %v546
    %v1377 = vpop.f32.mrf.mxu0
    %v1378 = vadd.f32 %v1358, %v1377
    %1379 = vdwg.mxu0
    %1380 = vmatpush.xpose.msra.mxu0 0.0
    %1381 = vmatpush.xpose.msra.mxu0 0.0
    %1382 = vmatpush.xpose.msra.mxu0 0.0
    %1383 = vmatpush.xpose.msra.mxu0 0.0
    %1384 = vmatpush.xpose.msra.mxu0 0.0
    %1385 = vmatpush.xpose.msra.mxu0 0.0
    %1386 = vmatpush.xpose.msra.mxu0 0.0
    %1387 = vmatpush.xpose.msra.mxu0 0.0
    %1388 = vmatpush.xpose.msra.mxu0 0.0
    %1389 = vmatpush.xpose.msra.mxu0 0.0
    %1390 = vmatpush.xpose.msra.mxu0 0.0
    %1391 = vmatpush.xpose.msra.mxu0 0.0
    %1392 = vmatpush.xpose.msra.mxu0 %v415
    %1393 = vmatpush.xpose.msra.mxu0 %v319
    %1394 = vmatpush.xpose.msra.mxu0 %v223
    %1395 = vmatpush.xpose.msra.mxu0 %v127
    %1396 = vmatmul.f32.gmra.mxu0 %v547
    %v1397 = vpop.f32.mrf.mxu0
    %v1398 = vadd.f32 %v1378, %v1397
    %1399 = vdwg.mxu0
    %1400 = vmatpush.xpose.msra.mxu0 0.0
    %1401 = vmatpush.xpose.msra.mxu0 0.0
    %1402 = vmatpush.xpose.msra.mxu0 0.0
    %1403 = vmatpush.xpose.msra.mxu0 0.0
    %1404 = vmatpush.xpose.msra.mxu0 0.0
    %1405 = vmatpush.xpose.msra.mxu0 0.0
    %1406 = vmatpush.xpose.msra.mxu0 0.0
    %1407 = vmatpush.xpose.msra.mxu0 0.0
    %1408 = vmatpush.xpose.msra.mxu0 0.0
    %1409 = vmatpush.xpose.msra.mxu0 0.0
    %1410 = vmatpush.xpose.msra.mxu0 0.0
    %1411 = vmatpush.xpose.msra.mxu0 0.0
    %1412 = vmatpush.xpose.msra.mxu0 %v416
    %1413 = vmatpush.xpose.msra.mxu0 %v320
    %1414 = vmatpush.xpose.msra.mxu0 %v224
    %1415 = vmatpush.xpose.msra.mxu0 %v128
    %1416 = vmatmul.f32.gmra.mxu0 %v548
    %v1417 = vpop.f32.mrf.mxu0
    %v1418 = vadd.f32 %v1398, %v1417
    %1419 = vdwg.mxu0
    %1420 = vmatpush.xpose.msra.mxu0 0.0
    %1421 = vmatpush.xpose.msra.mxu0 0.0
    %1422 = vmatpush.xpose.msra.mxu0 0.0
    %1423 = vmatpush.xpose.msra.mxu0 0.0
    %1424 = vmatpush.xpose.msra.mxu0 0.0
    %1425 = vmatpush.xpose.msra.mxu0 0.0
    %1426 = vmatpush.xpose.msra.mxu0 0.0
    %1427 = vmatpush.xpose.msra.mxu0 0.0
    %1428 = vmatpush.xpose.msra.mxu0 0.0
    %1429 = vmatpush.xpose.msra.mxu0 0.0
    %1430 = vmatpush.xpose.msra.mxu0 0.0
    %1431 = vmatpush.xpose.msra.mxu0 0.0
    %1432 = vmatpush.xpose.msra.mxu0 %v417
    %1433 = vmatpush.xpose.msra.mxu0 %v321
    %1434 = vmatpush.xpose.msra.mxu0 %v225
    %1435 = vmatpush.xpose.msra.mxu0 %v129
    %1436 = vmatmul.f32.gmra.mxu0 %v549
    %v1437 = vpop.f32.mrf.mxu0
    %v1438 = vadd.f32 %v1418, %v1437
    %1439 = vdwg.mxu0
    %1440 = vmatpush.xpose.msra.mxu0 0.0
    %1441 = vmatpush.xpose.msra.mxu0 0.0
    %1442 = vmatpush.xpose.msra.mxu0 0.0
    %1443 = vmatpush.xpose.msra.mxu0 0.0
    %1444 = vmatpush.xpose.msra.mxu0 0.0
    %1445 = vmatpush.xpose.msra.mxu0 0.0
    %1446 = vmatpush.xpose.msra.mxu0 0.0
    %1447 = vmatpush.xpose.msra.mxu0 0.0
    %1448 = vmatpush.xpose.msra.mxu0 0.0
    %1449 = vmatpush.xpose.msra.mxu0 0.0
    %1450 = vmatpush.xpose.msra.mxu0 0.0
    %1451 = vmatpush.xpose.msra.mxu0 0.0
    %1452 = vmatpush.xpose.msra.mxu0 %v418
    %1453 = vmatpush.xpose.msra.mxu0 %v322
    %1454 = vmatpush.xpose.msra.mxu0 %v226
    %1455 = vmatpush.xpose.msra.mxu0 %v130
    %1456 = vmatmul.f32.gmra.mxu0 %v550
    %v1457 = vpop.f32.mrf.mxu0
    %v1458 = vadd.f32 %v1438, %v1457
    %1459 = vdwg.mxu0
    %1460 = vmatpush.xpose.msra.mxu0 0.0
    %1461 = vmatpush.xpose.msra.mxu0 0.0
    %1462 = vmatpush.xpose.msra.mxu0 0.0
    %1463 = vmatpush.xpose.msra.mxu0 0.0
    %1464 = vmatpush.xpose.msra.mxu0 0.0
    %1465 = vmatpush.xpose.msra.mxu0 0.0
    %1466 = vmatpush.xpose.msra.mxu0 0.0
    %1467 = vmatpush.xpose.msra.mxu0 0.0
    %1468 = vmatpush.xpose.msra.mxu0 0.0
    %1469 = vmatpush.xpose.msra.mxu0 0.0
    %1470 = vmatpush.xpose.msra.mxu0 0.0
    %1471 = vmatpush.xpose.msra.mxu0 0.0
    %1472 = vmatpush.xpose.msra.mxu0 %v419
    %1473 = vmatpush.xpose.msra.mxu0 %v323
    %1474 = vmatpush.xpose.msra.mxu0 %v227
    %1475 = vmatpush.xpose.msra.mxu0 %v131
    %1476 = vmatmul.f32.gmra.mxu0 %v551
    %v1477 = vpop.f32.mrf.mxu0
    %v1478 = vadd.f32 %v1458, %v1477
    %1479 = vdwg.mxu0
    %1480 = vmatpush.xpose.msra.mxu0 0.0
    %1481 = vmatpush.xpose.msra.mxu0 0.0
    %1482 = vmatpush.xpose.msra.mxu0 0.0
    %1483 = vmatpush.xpose.msra.mxu0 0.0
    %1484 = vmatpush.xpose.msra.mxu0 0.0
    %1485 = vmatpush.xpose.msra.mxu0 0.0
    %1486 = vmatpush.xpose.msra.mxu0 0.0
    %1487 = vmatpush.xpose.msra.mxu0 0.0
    %1488 = vmatpush.xpose.msra.mxu0 0.0
    %1489 = vmatpush.xpose.msra.mxu0 0.0
    %1490 = vmatpush.xpose.msra.mxu0 0.0
    %1491 = vmatpush.xpose.msra.mxu0 0.0
    %1492 = vmatpush.xpose.msra.mxu0 %v420
    %1493 = vmatpush.xpose.msra.mxu0 %v324
    %1494 = vmatpush.xpose.msra.mxu0 %v228
    %1495 = vmatpush.xpose.msra.mxu0 %v132
    %1496 = vmatmul.f32.gmra.mxu0 %v552
    %v1497 = vpop.f32.mrf.mxu0
    %v1498 = vadd.f32 %v1478, %v1497
    %1499 = vdwg.mxu0
    %1500 = vmatpush.xpose.msra.mxu0 0.0
    %1501 = vmatpush.xpose.msra.mxu0 0.0
    %1502 = vmatpush.xpose.msra.mxu0 0.0
    %1503 = vmatpush.xpose.msra.mxu0 0.0
    %1504 = vmatpush.xpose.msra.mxu0 0.0
    %1505 = vmatpush.xpose.msra.mxu0 0.0
    %1506 = vmatpush.xpose.msra.mxu0 0.0
    %1507 = vmatpush.xpose.msra.mxu0 0.0
    %1508 = vmatpush.xpose.msra.mxu0 0.0
    %1509 = vmatpush.xpose.msra.mxu0 0.0
    %1510 = vmatpush.xpose.msra.mxu0 0.0
    %1511 = vmatpush.xpose.msra.mxu0 0.0
    %1512 = vmatpush.xpose.msra.mxu0 %v421
    %1513 = vmatpush.xpose.msra.mxu0 %v325
    %1514 = vmatpush.xpose.msra.mxu0 %v229
    %1515 = vmatpush.xpose.msra.mxu0 %v133
    %1516 = vmatmul.f32.gmra.mxu0 %v553
    %v1517 = vpop.f32.mrf.mxu0
    %v1518 = vadd.f32 %v1498, %v1517
    %1519 = vdwg.mxu0
    %1520 = vmatpush.xpose.msra.mxu0 0.0
    %1521 = vmatpush.xpose.msra.mxu0 0.0
    %1522 = vmatpush.xpose.msra.mxu0 0.0
    %1523 = vmatpush.xpose.msra.mxu0 0.0
    %1524 = vmatpush.xpose.msra.mxu0 0.0
    %1525 = vmatpush.xpose.msra.mxu0 0.0
    %1526 = vmatpush.xpose.msra.mxu0 0.0
    %1527 = vmatpush.xpose.msra.mxu0 0.0
    %1528 = vmatpush.xpose.msra.mxu0 0.0
    %1529 = vmatpush.xpose.msra.mxu0 0.0
    %1530 = vmatpush.xpose.msra.mxu0 0.0
    %1531 = vmatpush.xpose.msra.mxu0 0.0
    %1532 = vmatpush.xpose.msra.mxu0 %v422
    %1533 = vmatpush.xpose.msra.mxu0 %v326
    %1534 = vmatpush.xpose.msra.mxu0 %v230
    %1535 = vmatpush.xpose.msra.mxu0 %v134
    %1536 = vmatmul.f32.gmra.mxu0 %v556
    %v1537 = vpop.f32.mrf.mxu0
    %v1538 = vadd.f32 %v1518, %v1537
    %1539 = vdwg.mxu0
    %1540 = vmatpush.xpose.msra.mxu0 0.0
    %1541 = vmatpush.xpose.msra.mxu0 0.0
    %1542 = vmatpush.xpose.msra.mxu0 0.0
    %1543 = vmatpush.xpose.msra.mxu0 0.0
    %1544 = vmatpush.xpose.msra.mxu0 0.0
    %1545 = vmatpush.xpose.msra.mxu0 0.0
    %1546 = vmatpush.xpose.msra.mxu0 0.0
    %1547 = vmatpush.xpose.msra.mxu0 0.0
    %1548 = vmatpush.xpose.msra.mxu0 0.0
    %1549 = vmatpush.xpose.msra.mxu0 0.0
    %1550 = vmatpush.xpose.msra.mxu0 0.0
    %1551 = vmatpush.xpose.msra.mxu0 0.0
    %1552 = vmatpush.xpose.msra.mxu0 %v423
    %1553 = vmatpush.xpose.msra.mxu0 %v327
    %1554 = vmatpush.xpose.msra.mxu0 %v231
    %1555 = vmatpush.xpose.msra.mxu0 %v135
    %1556 = vmatmul.f32.gmra.mxu0 %v557
    %v1557 = vpop.f32.mrf.mxu0
    %v1558 = vadd.f32 %v1538, %v1557
    %1559 = vdwg.mxu0
    %1560 = vmatpush.xpose.msra.mxu0 0.0
    %1561 = vmatpush.xpose.msra.mxu0 0.0
    %1562 = vmatpush.xpose.msra.mxu0 0.0
    %1563 = vmatpush.xpose.msra.mxu0 0.0
    %1564 = vmatpush.xpose.msra.mxu0 0.0
    %1565 = vmatpush.xpose.msra.mxu0 0.0
    %1566 = vmatpush.xpose.msra.mxu0 0.0
    %1567 = vmatpush.xpose.msra.mxu0 0.0
    %1568 = vmatpush.xpose.msra.mxu0 0.0
    %1569 = vmatpush.xpose.msra.mxu0 0.0
    %1570 = vmatpush.xpose.msra.mxu0 0.0
    %1571 = vmatpush.xpose.msra.mxu0 0.0
    %1572 = vmatpush.xpose.msra.mxu0 %v424
    %1573 = vmatpush.xpose.msra.mxu0 %v328
    %1574 = vmatpush.xpose.msra.mxu0 %v232
    %1575 = vmatpush.xpose.msra.mxu0 %v136
    %1576 = vmatmul.f32.gmra.mxu0 %v558
    %v1577 = vpop.f32.mrf.mxu0
    %v1578 = vadd.f32 %v1558, %v1577
    %1579 = vdwg.mxu0
    %1580 = vmatpush.xpose.msra.mxu0 0.0
    %1581 = vmatpush.xpose.msra.mxu0 0.0
    %1582 = vmatpush.xpose.msra.mxu0 0.0
    %1583 = vmatpush.xpose.msra.mxu0 0.0
    %1584 = vmatpush.xpose.msra.mxu0 0.0
    %1585 = vmatpush.xpose.msra.mxu0 0.0
    %1586 = vmatpush.xpose.msra.mxu0 0.0
    %1587 = vmatpush.xpose.msra.mxu0 0.0
    %1588 = vmatpush.xpose.msra.mxu0 0.0
    %1589 = vmatpush.xpose.msra.mxu0 0.0
    %1590 = vmatpush.xpose.msra.mxu0 0.0
    %1591 = vmatpush.xpose.msra.mxu0 0.0
    %1592 = vmatpush.xpose.msra.mxu0 %v425
    %1593 = vmatpush.xpose.msra.mxu0 %v329
    %1594 = vmatpush.xpose.msra.mxu0 %v233
    %1595 = vmatpush.xpose.msra.mxu0 %v137
    %1596 = vmatmul.f32.gmra.mxu0 %v559
    %v1597 = vpop.f32.mrf.mxu0
    %v1598 = vadd.f32 %v1578, %v1597
    %1599 = vdwg.mxu0
    %1600 = vmatpush.xpose.msra.mxu0 0.0
    %1601 = vmatpush.xpose.msra.mxu0 0.0
    %1602 = vmatpush.xpose.msra.mxu0 0.0
    %1603 = vmatpush.xpose.msra.mxu0 0.0
    %1604 = vmatpush.xpose.msra.mxu0 0.0
    %1605 = vmatpush.xpose.msra.mxu0 0.0
    %1606 = vmatpush.xpose.msra.mxu0 0.0
    %1607 = vmatpush.xpose.msra.mxu0 0.0
    %1608 = vmatpush.xpose.msra.mxu0 0.0
    %1609 = vmatpush.xpose.msra.mxu0 0.0
    %1610 = vmatpush.xpose.msra.mxu0 0.0
    %1611 = vmatpush.xpose.msra.mxu0 0.0
    %1612 = vmatpush.xpose.msra.mxu0 %v426
    %1613 = vmatpush.xpose.msra.mxu0 %v330
    %1614 = vmatpush.xpose.msra.mxu0 %v234
    %1615 = vmatpush.xpose.msra.mxu0 %v138
    %1616 = vmatmul.f32.gmra.mxu0 %v560
    %v1617 = vpop.f32.mrf.mxu0
    %v1618 = vadd.f32 %v1598, %v1617
    %1619 = vdwg.mxu0
    %1620 = vmatpush.xpose.msra.mxu0 0.0
    %1621 = vmatpush.xpose.msra.mxu0 0.0
    %1622 = vmatpush.xpose.msra.mxu0 0.0
    %1623 = vmatpush.xpose.msra.mxu0 0.0
    %1624 = vmatpush.xpose.msra.mxu0 0.0
    %1625 = vmatpush.xpose.msra.mxu0 0.0
    %1626 = vmatpush.xpose.msra.mxu0 0.0
    %1627 = vmatpush.xpose.msra.mxu0 0.0
    %1628 = vmatpush.xpose.msra.mxu0 0.0
    %1629 = vmatpush.xpose.msra.mxu0 0.0
    %1630 = vmatpush.xpose.msra.mxu0 0.0
    %1631 = vmatpush.xpose.msra.mxu0 0.0
    %1632 = vmatpush.xpose.msra.mxu0 %v427
    %1633 = vmatpush.xpose.msra.mxu0 %v331
    %1634 = vmatpush.xpose.msra.mxu0 %v235
    %1635 = vmatpush.xpose.msra.mxu0 %v139
    %1636 = vmatmul.f32.gmra.mxu0 %v561
    %v1637 = vpop.f32.mrf.mxu0
    %v1638 = vadd.f32 %v1618, %v1637
    %1639 = vdwg.mxu0
    %1640 = vmatpush.xpose.msra.mxu0 0.0
    %1641 = vmatpush.xpose.msra.mxu0 0.0
    %1642 = vmatpush.xpose.msra.mxu0 0.0
    %1643 = vmatpush.xpose.msra.mxu0 0.0
    %1644 = vmatpush.xpose.msra.mxu0 0.0
    %1645 = vmatpush.xpose.msra.mxu0 0.0
    %1646 = vmatpush.xpose.msra.mxu0 0.0
    %1647 = vmatpush.xpose.msra.mxu0 0.0
    %1648 = vmatpush.xpose.msra.mxu0 0.0
    %1649 = vmatpush.xpose.msra.mxu0 0.0
    %1650 = vmatpush.xpose.msra.mxu0 0.0
    %1651 = vmatpush.xpose.msra.mxu0 0.0
    %1652 = vmatpush.xpose.msra.mxu0 %v428
    %1653 = vmatpush.xpose.msra.mxu0 %v332
    %1654 = vmatpush.xpose.msra.mxu0 %v236
    %1655 = vmatpush.xpose.msra.mxu0 %v140
    %1656 = vmatmul.f32.gmra.mxu0 %v562
    %v1657 = vpop.f32.mrf.mxu0
    %v1658 = vadd.f32 %v1638, %v1657
    %1659 = vdwg.mxu0
    %1660 = vmatpush.xpose.msra.mxu0 0.0
    %1661 = vmatpush.xpose.msra.mxu0 0.0
    %1662 = vmatpush.xpose.msra.mxu0 0.0
    %1663 = vmatpush.xpose.msra.mxu0 0.0
    %1664 = vmatpush.xpose.msra.mxu0 0.0
    %1665 = vmatpush.xpose.msra.mxu0 0.0
    %1666 = vmatpush.xpose.msra.mxu0 0.0
    %1667 = vmatpush.xpose.msra.mxu0 0.0
    %1668 = vmatpush.xpose.msra.mxu0 0.0
    %1669 = vmatpush.xpose.msra.mxu0 0.0
    %1670 = vmatpush.xpose.msra.mxu0 0.0
    %1671 = vmatpush.xpose.msra.mxu0 0.0
    %1672 = vmatpush.xpose.msra.mxu0 %v429
    %1673 = vmatpush.xpose.msra.mxu0 %v333
    %1674 = vmatpush.xpose.msra.mxu0 %v237
    %1675 = vmatpush.xpose.msra.mxu0 %v141
    %1676 = vmatmul.f32.gmra.mxu0 %v563
    %v1677 = vpop.f32.mrf.mxu0
    %v1678 = vadd.f32 %v1658, %v1677
    %1679 = vdwg.mxu0
    %1680 = vmatpush.xpose.msra.mxu0 0.0
    %1681 = vmatpush.xpose.msra.mxu0 0.0
    %1682 = vmatpush.xpose.msra.mxu0 0.0
    %1683 = vmatpush.xpose.msra.mxu0 0.0
    %1684 = vmatpush.xpose.msra.mxu0 0.0
    %1685 = vmatpush.xpose.msra.mxu0 0.0
    %1686 = vmatpush.xpose.msra.mxu0 0.0
    %1687 = vmatpush.xpose.msra.mxu0 0.0
    %1688 = vmatpush.xpose.msra.mxu0 0.0
    %1689 = vmatpush.xpose.msra.mxu0 0.0
    %1690 = vmatpush.xpose.msra.mxu0 0.0
    %1691 = vmatpush.xpose.msra.mxu0 0.0
    %1692 = vmatpush.xpose.msra.mxu0 %v430
    %1693 = vmatpush.xpose.msra.mxu0 %v334
    %1694 = vmatpush.xpose.msra.mxu0 %v238
    %1695 = vmatpush.xpose.msra.mxu0 %v142
    %1696 = vmatmul.f32.gmra.mxu0 %v566
    %v1697 = vpop.f32.mrf.mxu0
    %v1698 = vadd.f32 %v1678, %v1697
    %1699 = vdwg.mxu0
    %1700 = vmatpush.xpose.msra.mxu0 0.0
    %1701 = vmatpush.xpose.msra.mxu0 0.0
    %1702 = vmatpush.xpose.msra.mxu0 0.0
    %1703 = vmatpush.xpose.msra.mxu0 0.0
    %1704 = vmatpush.xpose.msra.mxu0 0.0
    %1705 = vmatpush.xpose.msra.mxu0 0.0
    %1706 = vmatpush.xpose.msra.mxu0 0.0
    %1707 = vmatpush.xpose.msra.mxu0 0.0
    %1708 = vmatpush.xpose.msra.mxu0 0.0
    %1709 = vmatpush.xpose.msra.mxu0 0.0
    %1710 = vmatpush.xpose.msra.mxu0 0.0
    %1711 = vmatpush.xpose.msra.mxu0 0.0
    %1712 = vmatpush.xpose.msra.mxu0 %v431
    %1713 = vmatpush.xpose.msra.mxu0 %v335
    %1714 = vmatpush.xpose.msra.mxu0 %v239
    %1715 = vmatpush.xpose.msra.mxu0 %v143
    %1716 = vmatmul.f32.gmra.mxu0 %v567
    %v1717 = vpop.f32.mrf.mxu0
    %v1718 = vadd.f32 %v1698, %v1717
    %1719 = vdwg.mxu0
    %1720 = vmatpush.xpose.msra.mxu0 0.0
    %1721 = vmatpush.xpose.msra.mxu0 0.0
    %1722 = vmatpush.xpose.msra.mxu0 0.0
    %1723 = vmatpush.xpose.msra.mxu0 0.0
    %1724 = vmatpush.xpose.msra.mxu0 0.0
    %1725 = vmatpush.xpose.msra.mxu0 0.0
    %1726 = vmatpush.xpose.msra.mxu0 0.0
    %1727 = vmatpush.xpose.msra.mxu0 0.0
    %1728 = vmatpush.xpose.msra.mxu0 0.0
    %1729 = vmatpush.xpose.msra.mxu0 0.0
    %1730 = vmatpush.xpose.msra.mxu0 0.0
    %1731 = vmatpush.xpose.msra.mxu0 0.0
    %1732 = vmatpush.xpose.msra.mxu0 %v432
    %1733 = vmatpush.xpose.msra.mxu0 %v336
    %1734 = vmatpush.xpose.msra.mxu0 %v240
    %1735 = vmatpush.xpose.msra.mxu0 %v144
    %1736 = vmatmul.f32.gmra.mxu0 %v568
    %v1737 = vpop.f32.mrf.mxu0
    %v1738 = vadd.f32 %v1718, %v1737
    %1739 = vdwg.mxu0
    %1740 = vmatpush.xpose.msra.mxu0 0.0
    %1741 = vmatpush.xpose.msra.mxu0 0.0
    %1742 = vmatpush.xpose.msra.mxu0 0.0
    %1743 = vmatpush.xpose.msra.mxu0 0.0
    %1744 = vmatpush.xpose.msra.mxu0 0.0
    %1745 = vmatpush.xpose.msra.mxu0 0.0
    %1746 = vmatpush.xpose.msra.mxu0 0.0
    %1747 = vmatpush.xpose.msra.mxu0 0.0
    %1748 = vmatpush.xpose.msra.mxu0 0.0
    %1749 = vmatpush.xpose.msra.mxu0 0.0
    %1750 = vmatpush.xpose.msra.mxu0 0.0
    %1751 = vmatpush.xpose.msra.mxu0 0.0
    %1752 = vmatpush.xpose.msra.mxu0 %v433
    %1753 = vmatpush.xpose.msra.mxu0 %v337
    %1754 = vmatpush.xpose.msra.mxu0 %v241
    %1755 = vmatpush.xpose.msra.mxu0 %v145
    %1756 = vmatmul.f32.gmra.mxu0 %v569
    %v1757 = vpop.f32.mrf.mxu0
    %v1758 = vadd.f32 %v1738, %v1757
    %1759 = vdwg.mxu0
    %1760 = vmatpush.xpose.msra.mxu0 0.0
    %1761 = vmatpush.xpose.msra.mxu0 0.0
    %1762 = vmatpush.xpose.msra.mxu0 0.0
    %1763 = vmatpush.xpose.msra.mxu0 0.0
    %1764 = vmatpush.xpose.msra.mxu0 0.0
    %1765 = vmatpush.xpose.msra.mxu0 0.0
    %1766 = vmatpush.xpose.msra.mxu0 0.0
    %1767 = vmatpush.xpose.msra.mxu0 0.0
    %1768 = vmatpush.xpose.msra.mxu0 0.0
    %1769 = vmatpush.xpose.msra.mxu0 0.0
    %1770 = vmatpush.xpose.msra.mxu0 0.0
    %1771 = vmatpush.xpose.msra.mxu0 0.0
    %1772 = vmatpush.xpose.msra.mxu0 %v434
    %1773 = vmatpush.xpose.msra.mxu0 %v338
    %1774 = vmatpush.xpose.msra.mxu0 %v242
    %1775 = vmatpush.xpose.msra.mxu0 %v146
    %1776 = vmatmul.f32.gmra.mxu0 %v570
    %v1777 = vpop.f32.mrf.mxu0
    %v1778 = vadd.f32 %v1758, %v1777
    %1779 = vdwg.mxu0
    %1780 = vmatpush.xpose.msra.mxu0 0.0
    %1781 = vmatpush.xpose.msra.mxu0 0.0
    %1782 = vmatpush.xpose.msra.mxu0 0.0
    %1783 = vmatpush.xpose.msra.mxu0 0.0
    %1784 = vmatpush.xpose.msra.mxu0 0.0
    %1785 = vmatpush.xpose.msra.mxu0 0.0
    %1786 = vmatpush.xpose.msra.mxu0 0.0
    %1787 = vmatpush.xpose.msra.mxu0 0.0
    %1788 = vmatpush.xpose.msra.mxu0 0.0
    %1789 = vmatpush.xpose.msra.mxu0 0.0
    %1790 = vmatpush.xpose.msra.mxu0 0.0
    %1791 = vmatpush.xpose.msra.mxu0 0.0
    %1792 = vmatpush.xpose.msra.mxu0 %v435
    %1793 = vmatpush.xpose.msra.mxu0 %v339
    %1794 = vmatpush.xpose.msra.mxu0 %v243
    %1795 = vmatpush.xpose.msra.mxu0 %v147
    %1796 = vmatmul.f32.gmra.mxu0 %v571
    %v1797 = vpop.f32.mrf.mxu0
    %v1798 = vadd.f32 %v1778, %v1797
    %1799 = vdwg.mxu0
    %1800 = vmatpush.xpose.msra.mxu0 0.0
    %1801 = vmatpush.xpose.msra.mxu0 0.0
    %1802 = vmatpush.xpose.msra.mxu0 0.0
    %1803 = vmatpush.xpose.msra.mxu0 0.0
    %1804 = vmatpush.xpose.msra.mxu0 0.0
    %1805 = vmatpush.xpose.msra.mxu0 0.0
    %1806 = vmatpush.xpose.msra.mxu0 0.0
    %1807 = vmatpush.xpose.msra.mxu0 0.0
    %1808 = vmatpush.xpose.msra.mxu0 0.0
    %1809 = vmatpush.xpose.msra.mxu0 0.0
    %1810 = vmatpush.xpose.msra.mxu0 0.0
    %1811 = vmatpush.xpose.msra.mxu0 0.0
    %1812 = vmatpush.xpose.msra.mxu0 %v436
    %1813 = vmatpush.xpose.msra.mxu0 %v340
    %1814 = vmatpush.xpose.msra.mxu0 %v244
    %1815 = vmatpush.xpose.msra.mxu0 %v148
    %1816 = vmatmul.f32.gmra.mxu0 %v572
    %v1817 = vpop.f32.mrf.mxu0
    %v1818 = vadd.f32 %v1798, %v1817
    %1819 = vdwg.mxu0
    %1820 = vmatpush.xpose.msra.mxu0 0.0
    %1821 = vmatpush.xpose.msra.mxu0 0.0
    %1822 = vmatpush.xpose.msra.mxu0 0.0
    %1823 = vmatpush.xpose.msra.mxu0 0.0
    %1824 = vmatpush.xpose.msra.mxu0 0.0
    %1825 = vmatpush.xpose.msra.mxu0 0.0
    %1826 = vmatpush.xpose.msra.mxu0 0.0
    %1827 = vmatpush.xpose.msra.mxu0 0.0
    %1828 = vmatpush.xpose.msra.mxu0 0.0
    %1829 = vmatpush.xpose.msra.mxu0 0.0
    %1830 = vmatpush.xpose.msra.mxu0 0.0
    %1831 = vmatpush.xpose.msra.mxu0 0.0
    %1832 = vmatpush.xpose.msra.mxu0 %v437
    %1833 = vmatpush.xpose.msra.mxu0 %v341
    %1834 = vmatpush.xpose.msra.mxu0 %v245
    %1835 = vmatpush.xpose.msra.mxu0 %v149
    %1836 = vmatmul.f32.gmra.mxu0 %v573
    %v1837 = vpop.f32.mrf.mxu0
    %v1838 = vadd.f32 %v1818, %v1837
    %1839 = vdwg.mxu0
    %1840 = vmatpush.xpose.msra.mxu0 0.0
    %1841 = vmatpush.xpose.msra.mxu0 0.0
    %1842 = vmatpush.xpose.msra.mxu0 0.0
    %1843 = vmatpush.xpose.msra.mxu0 0.0
    %1844 = vmatpush.xpose.msra.mxu0 0.0
    %1845 = vmatpush.xpose.msra.mxu0 0.0
    %1846 = vmatpush.xpose.msra.mxu0 0.0
    %1847 = vmatpush.xpose.msra.mxu0 0.0
    %1848 = vmatpush.xpose.msra.mxu0 0.0
    %1849 = vmatpush.xpose.msra.mxu0 0.0
    %1850 = vmatpush.xpose.msra.mxu0 0.0
    %1851 = vmatpush.xpose.msra.mxu0 0.0
    %1852 = vmatpush.xpose.msra.mxu0 %v438
    %1853 = vmatpush.xpose.msra.mxu0 %v342
    %1854 = vmatpush.xpose.msra.mxu0 %v246
    %1855 = vmatpush.xpose.msra.mxu0 %v150
    %1856 = vmatmul.f32.gmra.mxu0 %v576
    %v1857 = vpop.f32.mrf.mxu0
    %v1858 = vadd.f32 %v1838, %v1857
    %1859 = vdwg.mxu0
    %1860 = vmatpush.xpose.msra.mxu0 0.0
    %1861 = vmatpush.xpose.msra.mxu0 0.0
    %1862 = vmatpush.xpose.msra.mxu0 0.0
    %1863 = vmatpush.xpose.msra.mxu0 0.0
    %1864 = vmatpush.xpose.msra.mxu0 0.0
    %1865 = vmatpush.xpose.msra.mxu0 0.0
    %1866 = vmatpush.xpose.msra.mxu0 0.0
    %1867 = vmatpush.xpose.msra.mxu0 0.0
    %1868 = vmatpush.xpose.msra.mxu0 0.0
    %1869 = vmatpush.xpose.msra.mxu0 0.0
    %1870 = vmatpush.xpose.msra.mxu0 0.0
    %1871 = vmatpush.xpose.msra.mxu0 0.0
    %1872 = vmatpush.xpose.msra.mxu0 %v439
    %1873 = vmatpush.xpose.msra.mxu0 %v343
    %1874 = vmatpush.xpose.msra.mxu0 %v247
    %1875 = vmatpush.xpose.msra.mxu0 %v151
    %1876 = vmatmul.f32.gmra.mxu0 %v577
    %v1877 = vpop.f32.mrf.mxu0
    %v1878 = vadd.f32 %v1858, %v1877
    %1879 = vdwg.mxu0
    %1880 = vmatpush.xpose.msra.mxu0 0.0
    %1881 = vmatpush.xpose.msra.mxu0 0.0
    %1882 = vmatpush.xpose.msra.mxu0 0.0
    %1883 = vmatpush.xpose.msra.mxu0 0.0
    %1884 = vmatpush.xpose.msra.mxu0 0.0
    %1885 = vmatpush.xpose.msra.mxu0 0.0
    %1886 = vmatpush.xpose.msra.mxu0 0.0
    %1887 = vmatpush.xpose.msra.mxu0 0.0
    %1888 = vmatpush.xpose.msra.mxu0 0.0
    %1889 = vmatpush.xpose.msra.mxu0 0.0
    %1890 = vmatpush.xpose.msra.mxu0 0.0
    %1891 = vmatpush.xpose.msra.mxu0 0.0
    %1892 = vmatpush.xpose.msra.mxu0 %v440
    %1893 = vmatpush.xpose.msra.mxu0 %v344
    %1894 = vmatpush.xpose.msra.mxu0 %v248
    %1895 = vmatpush.xpose.msra.mxu0 %v152
    %1896 = vmatmul.f32.gmra.mxu0 %v578
    %v1897 = vpop.f32.mrf.mxu0
    %v1898 = vadd.f32 %v1878, %v1897
    %1899 = vdwg.mxu0
    %1900 = vmatpush.xpose.msra.mxu0 0.0
    %1901 = vmatpush.xpose.msra.mxu0 0.0
    %1902 = vmatpush.xpose.msra.mxu0 0.0
    %1903 = vmatpush.xpose.msra.mxu0 0.0
    %1904 = vmatpush.xpose.msra.mxu0 0.0
    %1905 = vmatpush.xpose.msra.mxu0 0.0
    %1906 = vmatpush.xpose.msra.mxu0 0.0
    %1907 = vmatpush.xpose.msra.mxu0 0.0
    %1908 = vmatpush.xpose.msra.mxu0 0.0
    %1909 = vmatpush.xpose.msra.mxu0 0.0
    %1910 = vmatpush.xpose.msra.mxu0 0.0
    %1911 = vmatpush.xpose.msra.mxu0 0.0
    %1912 = vmatpush.xpose.msra.mxu0 %v441
    %1913 = vmatpush.xpose.msra.mxu0 %v345
    %1914 = vmatpush.xpose.msra.mxu0 %v249
    %1915 = vmatpush.xpose.msra.mxu0 %v153
    %1916 = vmatmul.f32.gmra.mxu0 %v579
    %v1917 = vpop.f32.mrf.mxu0
    %v1918 = vadd.f32 %v1898, %v1917
    %1919 = vdwg.mxu0
    %1920 = vmatpush.xpose.msra.mxu0 0.0
    %1921 = vmatpush.xpose.msra.mxu0 0.0
    %1922 = vmatpush.xpose.msra.mxu0 0.0
    %1923 = vmatpush.xpose.msra.mxu0 0.0
    %1924 = vmatpush.xpose.msra.mxu0 0.0
    %1925 = vmatpush.xpose.msra.mxu0 0.0
    %1926 = vmatpush.xpose.msra.mxu0 0.0
    %1927 = vmatpush.xpose.msra.mxu0 0.0
    %1928 = vmatpush.xpose.msra.mxu0 0.0
    %1929 = vmatpush.xpose.msra.mxu0 0.0
    %1930 = vmatpush.xpose.msra.mxu0 0.0
    %1931 = vmatpush.xpose.msra.mxu0 0.0
    %1932 = vmatpush.xpose.msra.mxu0 %v442
    %1933 = vmatpush.xpose.msra.mxu0 %v346
    %1934 = vmatpush.xpose.msra.mxu0 %v250
    %1935 = vmatpush.xpose.msra.mxu0 %v154
    %1936 = vmatmul.f32.gmra.mxu0 %v580
    %v1937 = vpop.f32.mrf.mxu0
    %v1938 = vadd.f32 %v1918, %v1937
    %1939 = vdwg.mxu0
    %1940 = vmatpush.xpose.msra.mxu0 0.0
    %1941 = vmatpush.xpose.msra.mxu0 0.0
    %1942 = vmatpush.xpose.msra.mxu0 0.0
    %1943 = vmatpush.xpose.msra.mxu0 0.0
    %1944 = vmatpush.xpose.msra.mxu0 0.0
    %1945 = vmatpush.xpose.msra.mxu0 0.0
    %1946 = vmatpush.xpose.msra.mxu0 0.0
    %1947 = vmatpush.xpose.msra.mxu0 0.0
    %1948 = vmatpush.xpose.msra.mxu0 0.0
    %1949 = vmatpush.xpose.msra.mxu0 0.0
    %1950 = vmatpush.xpose.msra.mxu0 0.0
    %1951 = vmatpush.xpose.msra.mxu0 0.0
    %1952 = vmatpush.xpose.msra.mxu0 %v443
    %1953 = vmatpush.xpose.msra.mxu0 %v347
    %1954 = vmatpush.xpose.msra.mxu0 %v251
    %1955 = vmatpush.xpose.msra.mxu0 %v155
    %1956 = vmatmul.f32.gmra.mxu0 %v581
    %v1957 = vpop.f32.mrf.mxu0
    %v1958 = vadd.f32 %v1938, %v1957
    %1959 = vdwg.mxu0
    %1960 = vmatpush.xpose.msra.mxu0 0.0
    %1961 = vmatpush.xpose.msra.mxu0 0.0
    %1962 = vmatpush.xpose.msra.mxu0 0.0
    %1963 = vmatpush.xpose.msra.mxu0 0.0
    %1964 = vmatpush.xpose.msra.mxu0 0.0
    %1965 = vmatpush.xpose.msra.mxu0 0.0
    %1966 = vmatpush.xpose.msra.mxu0 0.0
    %1967 = vmatpush.xpose.msra.mxu0 0.0
    %1968 = vmatpush.xpose.msra.mxu0 0.0
    %1969 = vmatpush.xpose.msra.mxu0 0.0
    %1970 = vmatpush.xpose.msra.mxu0 0.0
    %1971 = vmatpush.xpose.msra.mxu0 0.0
    %1972 = vmatpush.xpose.msra.mxu0 %v444
    %1973 = vmatpush.xpose.msra.mxu0 %v348
    %1974 = vmatpush.xpose.msra.mxu0 %v252
    %1975 = vmatpush.xpose.msra.mxu0 %v156
    %1976 = vmatmul.f32.gmra.mxu0 %v582
    %v1977 = vpop.f32.mrf.mxu0
    %v1978 = vadd.f32 %v1958, %v1977
    %1979 = vdwg.mxu0
    %1980 = vmatpush.xpose.msra.mxu0 0.0
    %1981 = vmatpush.xpose.msra.mxu0 0.0
    %1982 = vmatpush.xpose.msra.mxu0 0.0
    %1983 = vmatpush.xpose.msra.mxu0 0.0
    %1984 = vmatpush.xpose.msra.mxu0 0.0
    %1985 = vmatpush.xpose.msra.mxu0 0.0
    %1986 = vmatpush.xpose.msra.mxu0 0.0
    %1987 = vmatpush.xpose.msra.mxu0 0.0
    %1988 = vmatpush.xpose.msra.mxu0 0.0
    %1989 = vmatpush.xpose.msra.mxu0 0.0
    %1990 = vmatpush.xpose.msra.mxu0 0.0
    %1991 = vmatpush.xpose.msra.mxu0 0.0
    %1992 = vmatpush.xpose.msra.mxu0 %v445
    %1993 = vmatpush.xpose.msra.mxu0 %v349
    %1994 = vmatpush.xpose.msra.mxu0 %v253
    %1995 = vmatpush.xpose.msra.mxu0 %v157
    %1996 = vmatmul.f32.gmra.mxu0 %v583
    %v1997 = vpop.f32.mrf.mxu0
    %v1998 = vadd.f32 %v1978, %v1997
    %1999 = vdwg.mxu0
    %2000 = vmatpush.xpose.msra.mxu0 0.0
    %2001 = vmatpush.xpose.msra.mxu0 0.0
    %2002 = vmatpush.xpose.msra.mxu0 0.0
    %2003 = vmatpush.xpose.msra.mxu0 0.0
    %2004 = vmatpush.xpose.msra.mxu0 0.0
    %2005 = vmatpush.xpose.msra.mxu0 0.0
    %2006 = vmatpush.xpose.msra.mxu0 0.0
    %2007 = vmatpush.xpose.msra.mxu0 0.0
    %2008 = vmatpush.xpose.msra.mxu0 0.0
    %2009 = vmatpush.xpose.msra.mxu0 0.0
    %2010 = vmatpush.xpose.msra.mxu0 0.0
    %2011 = vmatpush.xpose.msra.mxu0 0.0
    %2012 = vmatpush.xpose.msra.mxu0 %v446
    %2013 = vmatpush.xpose.msra.mxu0 %v350
    %2014 = vmatpush.xpose.msra.mxu0 %v254
    %2015 = vmatpush.xpose.msra.mxu0 %v158
    %2016 = vmatmul.f32.gmra.mxu0 %v586
    %v2017 = vpop.f32.mrf.mxu0
    %v2018 = vadd.f32 %v1998, %v2017
    %2019 = vdwg.mxu0
    %2020 = vmatpush.xpose.msra.mxu0 0.0
    %2021 = vmatpush.xpose.msra.mxu0 0.0
    %2022 = vmatpush.xpose.msra.mxu0 0.0
    %2023 = vmatpush.xpose.msra.mxu0 0.0
    %2024 = vmatpush.xpose.msra.mxu0 0.0
    %2025 = vmatpush.xpose.msra.mxu0 0.0
    %2026 = vmatpush.xpose.msra.mxu0 0.0
    %2027 = vmatpush.xpose.msra.mxu0 0.0
    %2028 = vmatpush.xpose.msra.mxu0 0.0
    %2029 = vmatpush.xpose.msra.mxu0 0.0
    %2030 = vmatpush.xpose.msra.mxu0 0.0
    %2031 = vmatpush.xpose.msra.mxu0 0.0
    %2032 = vmatpush.xpose.msra.mxu0 %v447
    %2033 = vmatpush.xpose.msra.mxu0 %v351
    %2034 = vmatpush.xpose.msra.mxu0 %v255
    %2035 = vmatpush.xpose.msra.mxu0 %v159
    %2036 = vmatmul.f32.gmra.mxu0 %v587
    %v2037 = vpop.f32.mrf.mxu0
    %v2038 = vadd.f32 %v2018, %v2037
    %2039 = vdwg.mxu0
    %2040 = vmatpush.xpose.msra.mxu0 0.0
    %2041 = vmatpush.xpose.msra.mxu0 0.0
    %2042 = vmatpush.xpose.msra.mxu0 0.0
    %2043 = vmatpush.xpose.msra.mxu0 0.0
    %2044 = vmatpush.xpose.msra.mxu0 0.0
    %2045 = vmatpush.xpose.msra.mxu0 0.0
    %2046 = vmatpush.xpose.msra.mxu0 0.0
    %2047 = vmatpush.xpose.msra.mxu0 0.0
    %2048 = vmatpush.xpose.msra.mxu0 0.0
    %2049 = vmatpush.xpose.msra.mxu0 0.0
    %2050 = vmatpush.xpose.msra.mxu0 0.0
    %2051 = vmatpush.xpose.msra.mxu0 0.0
    %2052 = vmatpush.xpose.msra.mxu0 %v448
    %2053 = vmatpush.xpose.msra.mxu0 %v352
    %2054 = vmatpush.xpose.msra.mxu0 %v256
    %2055 = vmatpush.xpose.msra.mxu0 %v160
    %2056 = vmatmul.f32.gmra.mxu0 %v588
    %v2057 = vpop.f32.mrf.mxu0
    %v2058 = vadd.f32 %v2038, %v2057
    %2059 = vdwg.mxu0
    %2060 = vmatpush.xpose.msra.mxu0 0.0
    %2061 = vmatpush.xpose.msra.mxu0 0.0
    %2062 = vmatpush.xpose.msra.mxu0 0.0
    %2063 = vmatpush.xpose.msra.mxu0 0.0
    %2064 = vmatpush.xpose.msra.mxu0 0.0
    %2065 = vmatpush.xpose.msra.mxu0 0.0
    %2066 = vmatpush.xpose.msra.mxu0 0.0
    %2067 = vmatpush.xpose.msra.mxu0 0.0
    %2068 = vmatpush.xpose.msra.mxu0 0.0
    %2069 = vmatpush.xpose.msra.mxu0 0.0
    %2070 = vmatpush.xpose.msra.mxu0 0.0
    %2071 = vmatpush.xpose.msra.mxu0 0.0
    %2072 = vmatpush.xpose.msra.mxu0 %v449
    %2073 = vmatpush.xpose.msra.mxu0 %v353
    %2074 = vmatpush.xpose.msra.mxu0 %v257
    %2075 = vmatpush.xpose.msra.mxu0 %v161
    %2076 = vmatmul.f32.gmra.mxu0 %v589
    %v2077 = vpop.f32.mrf.mxu0
    %v2078 = vadd.f32 %v2058, %v2077
    %2079 = vdwg.mxu0
    %2080 = vmatpush.xpose.msra.mxu0 0.0
    %2081 = vmatpush.xpose.msra.mxu0 0.0
    %2082 = vmatpush.xpose.msra.mxu0 0.0
    %2083 = vmatpush.xpose.msra.mxu0 0.0
    %2084 = vmatpush.xpose.msra.mxu0 0.0
    %2085 = vmatpush.xpose.msra.mxu0 0.0
    %2086 = vmatpush.xpose.msra.mxu0 0.0
    %2087 = vmatpush.xpose.msra.mxu0 0.0
    %2088 = vmatpush.xpose.msra.mxu0 0.0
    %2089 = vmatpush.xpose.msra.mxu0 0.0
    %2090 = vmatpush.xpose.msra.mxu0 0.0
    %2091 = vmatpush.xpose.msra.mxu0 0.0
    %2092 = vmatpush.xpose.msra.mxu0 %v450
    %2093 = vmatpush.xpose.msra.mxu0 %v354
    %2094 = vmatpush.xpose.msra.mxu0 %v258
    %2095 = vmatpush.xpose.msra.mxu0 %v162
    %2096 = vmatmul.f32.gmra.mxu0 %v590
    %v2097 = vpop.f32.mrf.mxu0
    %v2098 = vadd.f32 %v2078, %v2097
    %2099 = vdwg.mxu0
    %2100 = vmatpush.xpose.msra.mxu0 0.0
    %2101 = vmatpush.xpose.msra.mxu0 0.0
    %2102 = vmatpush.xpose.msra.mxu0 0.0
    %2103 = vmatpush.xpose.msra.mxu0 0.0
    %2104 = vmatpush.xpose.msra.mxu0 0.0
    %2105 = vmatpush.xpose.msra.mxu0 0.0
    %2106 = vmatpush.xpose.msra.mxu0 0.0
    %2107 = vmatpush.xpose.msra.mxu0 0.0
    %2108 = vmatpush.xpose.msra.mxu0 0.0
    %2109 = vmatpush.xpose.msra.mxu0 0.0
    %2110 = vmatpush.xpose.msra.mxu0 0.0
    %2111 = vmatpush.xpose.msra.mxu0 0.0
    %2112 = vmatpush.xpose.msra.mxu0 %v451
    %2113 = vmatpush.xpose.msra.mxu0 %v355
    %2114 = vmatpush.xpose.msra.mxu0 %v259
    %2115 = vmatpush.xpose.msra.mxu0 %v163
    %2116 = vmatmul.f32.gmra.mxu0 %v591
    %v2117 = vpop.f32.mrf.mxu0
    %v2118 = vadd.f32 %v2098, %v2117
    %2119 = vdwg.mxu0
    %2120 = vmatpush.xpose.msra.mxu0 0.0
    %2121 = vmatpush.xpose.msra.mxu0 0.0
    %2122 = vmatpush.xpose.msra.mxu0 0.0
    %2123 = vmatpush.xpose.msra.mxu0 0.0
    %2124 = vmatpush.xpose.msra.mxu0 0.0
    %2125 = vmatpush.xpose.msra.mxu0 0.0
    %2126 = vmatpush.xpose.msra.mxu0 0.0
    %2127 = vmatpush.xpose.msra.mxu0 0.0
    %2128 = vmatpush.xpose.msra.mxu0 0.0
    %2129 = vmatpush.xpose.msra.mxu0 0.0
    %2130 = vmatpush.xpose.msra.mxu0 0.0
    %2131 = vmatpush.xpose.msra.mxu0 0.0
    %2132 = vmatpush.xpose.msra.mxu0 %v452
    %2133 = vmatpush.xpose.msra.mxu0 %v356
    %2134 = vmatpush.xpose.msra.mxu0 %v260
    %2135 = vmatpush.xpose.msra.mxu0 %v164
    %2136 = vmatmul.f32.gmra.mxu0 %v592
    %v2137 = vpop.f32.mrf.mxu0
    %v2138 = vadd.f32 %v2118, %v2137
    %2139 = vdwg.mxu0
    %2140 = vmatpush.xpose.msra.mxu0 0.0
    %2141 = vmatpush.xpose.msra.mxu0 0.0
    %2142 = vmatpush.xpose.msra.mxu0 0.0
    %2143 = vmatpush.xpose.msra.mxu0 0.0
    %2144 = vmatpush.xpose.msra.mxu0 0.0
    %2145 = vmatpush.xpose.msra.mxu0 0.0
    %2146 = vmatpush.xpose.msra.mxu0 0.0
    %2147 = vmatpush.xpose.msra.mxu0 0.0
    %2148 = vmatpush.xpose.msra.mxu0 0.0
    %2149 = vmatpush.xpose.msra.mxu0 0.0
    %2150 = vmatpush.xpose.msra.mxu0 0.0
    %2151 = vmatpush.xpose.msra.mxu0 0.0
    %2152 = vmatpush.xpose.msra.mxu0 %v453
    %2153 = vmatpush.xpose.msra.mxu0 %v357
    %2154 = vmatpush.xpose.msra.mxu0 %v261
    %2155 = vmatpush.xpose.msra.mxu0 %v165
    %2156 = vmatmul.f32.gmra.mxu0 %v593
    %v2157 = vpop.f32.mrf.mxu0
    %v2158 = vadd.f32 %v2138, %v2157
    %2159 = vdwg.mxu0
    %2160 = vmatpush.xpose.msra.mxu0 0.0
    %2161 = vmatpush.xpose.msra.mxu0 0.0
    %2162 = vmatpush.xpose.msra.mxu0 0.0
    %2163 = vmatpush.xpose.msra.mxu0 0.0
    %2164 = vmatpush.xpose.msra.mxu0 0.0
    %2165 = vmatpush.xpose.msra.mxu0 0.0
    %2166 = vmatpush.xpose.msra.mxu0 0.0
    %2167 = vmatpush.xpose.msra.mxu0 0.0
    %2168 = vmatpush.xpose.msra.mxu0 0.0
    %2169 = vmatpush.xpose.msra.mxu0 0.0
    %2170 = vmatpush.xpose.msra.mxu0 0.0
    %2171 = vmatpush.xpose.msra.mxu0 0.0
    %2172 = vmatpush.xpose.msra.mxu0 %v454
    %2173 = vmatpush.xpose.msra.mxu0 %v358
    %2174 = vmatpush.xpose.msra.mxu0 %v262
    %2175 = vmatpush.xpose.msra.mxu0 %v166
    %2176 = vmatmul.f32.gmra.mxu0 %v596
    %v2177 = vpop.f32.mrf.mxu0
    %v2178 = vadd.f32 %v2158, %v2177
    %2179 = vdwg.mxu0
    %2180 = vmatpush.xpose.msra.mxu0 0.0
    %2181 = vmatpush.xpose.msra.mxu0 0.0
    %2182 = vmatpush.xpose.msra.mxu0 0.0
    %2183 = vmatpush.xpose.msra.mxu0 0.0
    %2184 = vmatpush.xpose.msra.mxu0 0.0
    %2185 = vmatpush.xpose.msra.mxu0 0.0
    %2186 = vmatpush.xpose.msra.mxu0 0.0
    %2187 = vmatpush.xpose.msra.mxu0 0.0
    %2188 = vmatpush.xpose.msra.mxu0 0.0
    %2189 = vmatpush.xpose.msra.mxu0 0.0
    %2190 = vmatpush.xpose.msra.mxu0 0.0
    %2191 = vmatpush.xpose.msra.mxu0 0.0
    %2192 = vmatpush.xpose.msra.mxu0 %v455
    %2193 = vmatpush.xpose.msra.mxu0 %v359
    %2194 = vmatpush.xpose.msra.mxu0 %v263
    %2195 = vmatpush.xpose.msra.mxu0 %v167
    %2196 = vmatmul.f32.gmra.mxu0 %v597
    %v2197 = vpop.f32.mrf.mxu0
    %v2198 = vadd.f32 %v2178, %v2197
    %2199 = vdwg.mxu0
    %2200 = vmatpush.xpose.msra.mxu0 0.0
    %2201 = vmatpush.xpose.msra.mxu0 0.0
    %2202 = vmatpush.xpose.msra.mxu0 0.0
    %2203 = vmatpush.xpose.msra.mxu0 0.0
    %2204 = vmatpush.xpose.msra.mxu0 0.0
    %2205 = vmatpush.xpose.msra.mxu0 0.0
    %2206 = vmatpush.xpose.msra.mxu0 0.0
    %2207 = vmatpush.xpose.msra.mxu0 0.0
    %2208 = vmatpush.xpose.msra.mxu0 0.0
    %2209 = vmatpush.xpose.msra.mxu0 0.0
    %2210 = vmatpush.xpose.msra.mxu0 0.0
    %2211 = vmatpush.xpose.msra.mxu0 0.0
    %2212 = vmatpush.xpose.msra.mxu0 %v456
    %2213 = vmatpush.xpose.msra.mxu0 %v360
    %2214 = vmatpush.xpose.msra.mxu0 %v264
    %2215 = vmatpush.xpose.msra.mxu0 %v168
    %2216 = vmatmul.f32.gmra.mxu0 %v598
    %v2217 = vpop.f32.mrf.mxu0
    %v2218 = vadd.f32 %v2198, %v2217
    %2219 = vdwg.mxu0
    %2220 = vmatpush.xpose.msra.mxu0 0.0
    %2221 = vmatpush.xpose.msra.mxu0 0.0
    %2222 = vmatpush.xpose.msra.mxu0 0.0
    %2223 = vmatpush.xpose.msra.mxu0 0.0
    %2224 = vmatpush.xpose.msra.mxu0 0.0
    %2225 = vmatpush.xpose.msra.mxu0 0.0
    %2226 = vmatpush.xpose.msra.mxu0 0.0
    %2227 = vmatpush.xpose.msra.mxu0 0.0
    %2228 = vmatpush.xpose.msra.mxu0 0.0
    %2229 = vmatpush.xpose.msra.mxu0 0.0
    %2230 = vmatpush.xpose.msra.mxu0 0.0
    %2231 = vmatpush.xpose.msra.mxu0 0.0
    %2232 = vmatpush.xpose.msra.mxu0 %v457
    %2233 = vmatpush.xpose.msra.mxu0 %v361
    %2234 = vmatpush.xpose.msra.mxu0 %v265
    %2235 = vmatpush.xpose.msra.mxu0 %v169
    %2236 = vmatmul.f32.gmra.mxu0 %v599
    %v2237 = vpop.f32.mrf.mxu0
    %v2238 = vadd.f32 %v2218, %v2237
    %2239 = vdwg.mxu0
    %2240 = vmatpush.xpose.msra.mxu0 0.0
    %2241 = vmatpush.xpose.msra.mxu0 0.0
    %2242 = vmatpush.xpose.msra.mxu0 0.0
    %2243 = vmatpush.xpose.msra.mxu0 0.0
    %2244 = vmatpush.xpose.msra.mxu0 0.0
    %2245 = vmatpush.xpose.msra.mxu0 0.0
    %2246 = vmatpush.xpose.msra.mxu0 0.0
    %2247 = vmatpush.xpose.msra.mxu0 0.0
    %2248 = vmatpush.xpose.msra.mxu0 0.0
    %2249 = vmatpush.xpose.msra.mxu0 0.0
    %2250 = vmatpush.xpose.msra.mxu0 0.0
    %2251 = vmatpush.xpose.msra.mxu0 0.0
    %2252 = vmatpush.xpose.msra.mxu0 %v458
    %2253 = vmatpush.xpose.msra.mxu0 %v362
    %2254 = vmatpush.xpose.msra.mxu0 %v266
    %2255 = vmatpush.xpose.msra.mxu0 %v170
    %2256 = vmatmul.f32.gmra.mxu0 %v600
    %v2257 = vpop.f32.mrf.mxu0
    %v2258 = vadd.f32 %v2238, %v2257
    %2259 = vdwg.mxu0
    %2260 = vmatpush.xpose.msra.mxu0 0.0
    %2261 = vmatpush.xpose.msra.mxu0 0.0
    %2262 = vmatpush.xpose.msra.mxu0 0.0
    %2263 = vmatpush.xpose.msra.mxu0 0.0
    %2264 = vmatpush.xpose.msra.mxu0 0.0
    %2265 = vmatpush.xpose.msra.mxu0 0.0
    %2266 = vmatpush.xpose.msra.mxu0 0.0
    %2267 = vmatpush.xpose.msra.mxu0 0.0
    %2268 = vmatpush.xpose.msra.mxu0 0.0
    %2269 = vmatpush.xpose.msra.mxu0 0.0
    %2270 = vmatpush.xpose.msra.mxu0 0.0
    %2271 = vmatpush.xpose.msra.mxu0 0.0
    %2272 = vmatpush.xpose.msra.mxu0 %v459
    %2273 = vmatpush.xpose.msra.mxu0 %v363
    %2274 = vmatpush.xpose.msra.mxu0 %v267
    %2275 = vmatpush.xpose.msra.mxu0 %v171
    %2276 = vmatmul.f32.gmra.mxu0 %v601
    %v2277 = vpop.f32.mrf.mxu0
    %v2278 = vadd.f32 %v2258, %v2277
    %2279 = vdwg.mxu0
    %2280 = vmatpush.xpose.msra.mxu0 0.0
    %2281 = vmatpush.xpose.msra.mxu0 0.0
    %2282 = vmatpush.xpose.msra.mxu0 0.0
    %2283 = vmatpush.xpose.msra.mxu0 0.0
    %2284 = vmatpush.xpose.msra.mxu0 0.0
    %2285 = vmatpush.xpose.msra.mxu0 0.0
    %2286 = vmatpush.xpose.msra.mxu0 0.0
    %2287 = vmatpush.xpose.msra.mxu0 0.0
    %2288 = vmatpush.xpose.msra.mxu0 0.0
    %2289 = vmatpush.xpose.msra.mxu0 0.0
    %2290 = vmatpush.xpose.msra.mxu0 0.0
    %2291 = vmatpush.xpose.msra.mxu0 0.0
    %2292 = vmatpush.xpose.msra.mxu0 %v460
    %2293 = vmatpush.xpose.msra.mxu0 %v364
    %2294 = vmatpush.xpose.msra.mxu0 %v268
    %2295 = vmatpush.xpose.msra.mxu0 %v172
    %2296 = vmatmul.f32.gmra.mxu0 %v602
    %v2297 = vpop.f32.mrf.mxu0
    %v2298 = vadd.f32 %v2278, %v2297
    %2299 = vdwg.mxu0
    %2300 = vmatpush.xpose.msra.mxu0 0.0
    %2301 = vmatpush.xpose.msra.mxu0 0.0
    %2302 = vmatpush.xpose.msra.mxu0 0.0
    %2303 = vmatpush.xpose.msra.mxu0 0.0
    %2304 = vmatpush.xpose.msra.mxu0 0.0
    %2305 = vmatpush.xpose.msra.mxu0 0.0
    %2306 = vmatpush.xpose.msra.mxu0 0.0
    %2307 = vmatpush.xpose.msra.mxu0 0.0
    %2308 = vmatpush.xpose.msra.mxu0 0.0
    %2309 = vmatpush.xpose.msra.mxu0 0.0
    %2310 = vmatpush.xpose.msra.mxu0 0.0
    %2311 = vmatpush.xpose.msra.mxu0 0.0
    %2312 = vmatpush.xpose.msra.mxu0 %v461
    %2313 = vmatpush.xpose.msra.mxu0 %v365
    %2314 = vmatpush.xpose.msra.mxu0 %v269
    %2315 = vmatpush.xpose.msra.mxu0 %v173
    %2316 = vmatmul.f32.gmra.mxu0 %v603
    %v2317 = vpop.f32.mrf.mxu0
    %v2318 = vadd.f32 %v2298, %v2317
    %2319 = vdwg.mxu0
    %2320 = vmatpush.xpose.msra.mxu0 0.0
    %2321 = vmatpush.xpose.msra.mxu0 0.0
    %2322 = vmatpush.xpose.msra.mxu0 0.0
    %2323 = vmatpush.xpose.msra.mxu0 0.0
    %2324 = vmatpush.xpose.msra.mxu0 0.0
    %2325 = vmatpush.xpose.msra.mxu0 0.0
    %2326 = vmatpush.xpose.msra.mxu0 0.0
    %2327 = vmatpush.xpose.msra.mxu0 0.0
    %2328 = vmatpush.xpose.msra.mxu0 0.0
    %2329 = vmatpush.xpose.msra.mxu0 0.0
    %2330 = vmatpush.xpose.msra.mxu0 0.0
    %2331 = vmatpush.xpose.msra.mxu0 0.0
    %2332 = vmatpush.xpose.msra.mxu0 %v462
    %2333 = vmatpush.xpose.msra.mxu0 %v366
    %2334 = vmatpush.xpose.msra.mxu0 %v270
    %2335 = vmatpush.xpose.msra.mxu0 %v174
    %2336 = vmatmul.f32.gmra.mxu0 %v606
    %v2337 = vpop.f32.mrf.mxu0
    %v2338 = vadd.f32 %v2318, %v2337
    %2339 = vdwg.mxu0
    %2340 = vmatpush.xpose.msra.mxu0 0.0
    %2341 = vmatpush.xpose.msra.mxu0 0.0
    %2342 = vmatpush.xpose.msra.mxu0 0.0
    %2343 = vmatpush.xpose.msra.mxu0 0.0
    %2344 = vmatpush.xpose.msra.mxu0 0.0
    %2345 = vmatpush.xpose.msra.mxu0 0.0
    %2346 = vmatpush.xpose.msra.mxu0 0.0
    %2347 = vmatpush.xpose.msra.mxu0 0.0
    %2348 = vmatpush.xpose.msra.mxu0 0.0
    %2349 = vmatpush.xpose.msra.mxu0 0.0
    %2350 = vmatpush.xpose.msra.mxu0 0.0
    %2351 = vmatpush.xpose.msra.mxu0 0.0
    %2352 = vmatpush.xpose.msra.mxu0 %v463
    %2353 = vmatpush.xpose.msra.mxu0 %v367
    %2354 = vmatpush.xpose.msra.mxu0 %v271
    %2355 = vmatpush.xpose.msra.mxu0 %v175
    %2356 = vmatmul.f32.gmra.mxu0 %v607
    %v2357 = vpop.f32.mrf.mxu0
    %v2358 = vadd.f32 %v2338, %v2357
    %2359 = vdwg.mxu0
    %2360 = vmatpush.xpose.msra.mxu0 0.0
    %2361 = vmatpush.xpose.msra.mxu0 0.0
    %2362 = vmatpush.xpose.msra.mxu0 0.0
    %2363 = vmatpush.xpose.msra.mxu0 0.0
    %2364 = vmatpush.xpose.msra.mxu0 0.0
    %2365 = vmatpush.xpose.msra.mxu0 0.0
    %2366 = vmatpush.xpose.msra.mxu0 0.0
    %2367 = vmatpush.xpose.msra.mxu0 0.0
    %2368 = vmatpush.xpose.msra.mxu0 0.0
    %2369 = vmatpush.xpose.msra.mxu0 0.0
    %2370 = vmatpush.xpose.msra.mxu0 0.0
    %2371 = vmatpush.xpose.msra.mxu0 0.0
    %2372 = vmatpush.xpose.msra.mxu0 %v464
    %2373 = vmatpush.xpose.msra.mxu0 %v368
    %2374 = vmatpush.xpose.msra.mxu0 %v272
    %2375 = vmatpush.xpose.msra.mxu0 %v176
    %2376 = vmatmul.f32.gmra.mxu0 %v608
    %v2377 = vpop.f32.mrf.mxu0
    %v2378 = vadd.f32 %v2358, %v2377
    %2379 = vdwg.mxu0
    %2380 = vmatpush.xpose.msra.mxu0 0.0
    %2381 = vmatpush.xpose.msra.mxu0 0.0
    %2382 = vmatpush.xpose.msra.mxu0 0.0
    %2383 = vmatpush.xpose.msra.mxu0 0.0
    %2384 = vmatpush.xpose.msra.mxu0 0.0
    %2385 = vmatpush.xpose.msra.mxu0 0.0
    %2386 = vmatpush.xpose.msra.mxu0 0.0
    %2387 = vmatpush.xpose.msra.mxu0 0.0
    %2388 = vmatpush.xpose.msra.mxu0 0.0
    %2389 = vmatpush.xpose.msra.mxu0 0.0
    %2390 = vmatpush.xpose.msra.mxu0 0.0
    %2391 = vmatpush.xpose.msra.mxu0 0.0
    %2392 = vmatpush.xpose.msra.mxu0 %v465
    %2393 = vmatpush.xpose.msra.mxu0 %v369
    %2394 = vmatpush.xpose.msra.mxu0 %v273
    %2395 = vmatpush.xpose.msra.mxu0 %v177
    %2396 = vmatmul.f32.gmra.mxu0 %v609
    %v2397 = vpop.f32.mrf.mxu0
    %v2398 = vadd.f32 %v2378, %v2397
    %2399 = vdwg.mxu0
    %2400 = vmatpush.xpose.msra.mxu0 0.0
    %2401 = vmatpush.xpose.msra.mxu0 0.0
    %2402 = vmatpush.xpose.msra.mxu0 0.0
    %2403 = vmatpush.xpose.msra.mxu0 0.0
    %2404 = vmatpush.xpose.msra.mxu0 0.0
    %2405 = vmatpush.xpose.msra.mxu0 0.0
    %2406 = vmatpush.xpose.msra.mxu0 0.0
    %2407 = vmatpush.xpose.msra.mxu0 0.0
    %2408 = vmatpush.xpose.msra.mxu0 0.0
    %2409 = vmatpush.xpose.msra.mxu0 0.0
    %2410 = vmatpush.xpose.msra.mxu0 0.0
    %2411 = vmatpush.xpose.msra.mxu0 0.0
    %2412 = vmatpush.xpose.msra.mxu0 %v466
    %2413 = vmatpush.xpose.msra.mxu0 %v370
    %2414 = vmatpush.xpose.msra.mxu0 %v274
    %2415 = vmatpush.xpose.msra.mxu0 %v178
    %2416 = vmatmul.f32.gmra.mxu0 %v610
    %v2417 = vpop.f32.mrf.mxu0
    %v2418 = vadd.f32 %v2398, %v2417
    %2419 = vdwg.mxu0
    %2420 = vmatpush.xpose.msra.mxu0 0.0
    %2421 = vmatpush.xpose.msra.mxu0 0.0
    %2422 = vmatpush.xpose.msra.mxu0 0.0
    %2423 = vmatpush.xpose.msra.mxu0 0.0
    %2424 = vmatpush.xpose.msra.mxu0 0.0
    %2425 = vmatpush.xpose.msra.mxu0 0.0
    %2426 = vmatpush.xpose.msra.mxu0 0.0
    %2427 = vmatpush.xpose.msra.mxu0 0.0
    %2428 = vmatpush.xpose.msra.mxu0 0.0
    %2429 = vmatpush.xpose.msra.mxu0 0.0
    %2430 = vmatpush.xpose.msra.mxu0 0.0
    %2431 = vmatpush.xpose.msra.mxu0 0.0
    %2432 = vmatpush.xpose.msra.mxu0 %v467
    %2433 = vmatpush.xpose.msra.mxu0 %v371
    %2434 = vmatpush.xpose.msra.mxu0 %v275
    %2435 = vmatpush.xpose.msra.mxu0 %v179
    %2436 = vmatmul.f32.gmra.mxu0 %v611
    %v2437 = vpop.f32.mrf.mxu0
    %v2438 = vadd.f32 %v2418, %v2437
    %2439 = vdwg.mxu0
    %2440 = vmatpush.xpose.msra.mxu0 0.0
    %2441 = vmatpush.xpose.msra.mxu0 0.0
    %2442 = vmatpush.xpose.msra.mxu0 0.0
    %2443 = vmatpush.xpose.msra.mxu0 0.0
    %2444 = vmatpush.xpose.msra.mxu0 0.0
    %2445 = vmatpush.xpose.msra.mxu0 0.0
    %2446 = vmatpush.xpose.msra.mxu0 0.0
    %2447 = vmatpush.xpose.msra.mxu0 0.0
    %2448 = vmatpush.xpose.msra.mxu0 0.0
    %2449 = vmatpush.xpose.msra.mxu0 0.0
    %2450 = vmatpush.xpose.msra.mxu0 0.0
    %2451 = vmatpush.xpose.msra.mxu0 0.0
    %2452 = vmatpush.xpose.msra.mxu0 %v468
    %2453 = vmatpush.xpose.msra.mxu0 %v372
    %2454 = vmatpush.xpose.msra.mxu0 %v276
    %2455 = vmatpush.xpose.msra.mxu0 %v180
    %2456 = vmatmul.f32.gmra.mxu0 %v612
    %v2457 = vpop.f32.mrf.mxu0
    %v2458 = vadd.f32 %v2438, %v2457
    %2459 = vdwg.mxu0
    %2460 = vmatpush.xpose.msra.mxu0 0.0
    %2461 = vmatpush.xpose.msra.mxu0 0.0
    %2462 = vmatpush.xpose.msra.mxu0 0.0
    %2463 = vmatpush.xpose.msra.mxu0 0.0
    %2464 = vmatpush.xpose.msra.mxu0 0.0
    %2465 = vmatpush.xpose.msra.mxu0 0.0
    %2466 = vmatpush.xpose.msra.mxu0 0.0
    %2467 = vmatpush.xpose.msra.mxu0 0.0
    %2468 = vmatpush.xpose.msra.mxu0 0.0
    %2469 = vmatpush.xpose.msra.mxu0 0.0
    %2470 = vmatpush.xpose.msra.mxu0 0.0
    %2471 = vmatpush.xpose.msra.mxu0 0.0
    %2472 = vmatpush.xpose.msra.mxu0 %v469
    %2473 = vmatpush.xpose.msra.mxu0 %v373
    %2474 = vmatpush.xpose.msra.mxu0 %v277
    %2475 = vmatpush.xpose.msra.mxu0 %v181
    %2476 = vmatmul.f32.gmra.mxu0 %v613
    %v2477 = vpop.f32.mrf.mxu0
    %v2478 = vadd.f32 %v2458, %v2477
    %2479 = vdwg.mxu0
    %2480 = vmatpush.xpose.msra.mxu0 0.0
    %2481 = vmatpush.xpose.msra.mxu0 0.0
    %2482 = vmatpush.xpose.msra.mxu0 0.0
    %2483 = vmatpush.xpose.msra.mxu0 0.0
    %2484 = vmatpush.xpose.msra.mxu0 0.0
    %2485 = vmatpush.xpose.msra.mxu0 0.0
    %2486 = vmatpush.xpose.msra.mxu0 0.0
    %2487 = vmatpush.xpose.msra.mxu0 0.0
    %2488 = vmatpush.xpose.msra.mxu0 0.0
    %2489 = vmatpush.xpose.msra.mxu0 0.0
    %2490 = vmatpush.xpose.msra.mxu0 0.0
    %2491 = vmatpush.xpose.msra.mxu0 0.0
    %2492 = vmatpush.xpose.msra.mxu0 %v470
    %2493 = vmatpush.xpose.msra.mxu0 %v374
    %2494 = vmatpush.xpose.msra.mxu0 %v278
    %2495 = vmatpush.xpose.msra.mxu0 %v182
    %2496 = vmatmul.f32.gmra.mxu0 %v616
    %v2497 = vpop.f32.mrf.mxu0
    %v2498 = vadd.f32 %v2478, %v2497
    %2499 = vdwg.mxu0
    %2500 = vmatpush.xpose.msra.mxu0 0.0
    %2501 = vmatpush.xpose.msra.mxu0 0.0
    %2502 = vmatpush.xpose.msra.mxu0 0.0
    %2503 = vmatpush.xpose.msra.mxu0 0.0
    %2504 = vmatpush.xpose.msra.mxu0 0.0
    %2505 = vmatpush.xpose.msra.mxu0 0.0
    %2506 = vmatpush.xpose.msra.mxu0 0.0
    %2507 = vmatpush.xpose.msra.mxu0 0.0
    %2508 = vmatpush.xpose.msra.mxu0 0.0
    %2509 = vmatpush.xpose.msra.mxu0 0.0
    %2510 = vmatpush.xpose.msra.mxu0 0.0
    %2511 = vmatpush.xpose.msra.mxu0 0.0
    %2512 = vmatpush.xpose.msra.mxu0 %v471
    %2513 = vmatpush.xpose.msra.mxu0 %v375
    %2514 = vmatpush.xpose.msra.mxu0 %v279
    %2515 = vmatpush.xpose.msra.mxu0 %v183
    %2516 = vmatmul.f32.gmra.mxu0 %v617
    %v2517 = vpop.f32.mrf.mxu0
    %v2518 = vadd.f32 %v2498, %v2517
    %2519 = vdwg.mxu0
    %2520 = vmatpush.xpose.msra.mxu0 0.0
    %2521 = vmatpush.xpose.msra.mxu0 0.0
    %2522 = vmatpush.xpose.msra.mxu0 0.0
    %2523 = vmatpush.xpose.msra.mxu0 0.0
    %2524 = vmatpush.xpose.msra.mxu0 0.0
    %2525 = vmatpush.xpose.msra.mxu0 0.0
    %2526 = vmatpush.xpose.msra.mxu0 0.0
    %2527 = vmatpush.xpose.msra.mxu0 0.0
    %2528 = vmatpush.xpose.msra.mxu0 0.0
    %2529 = vmatpush.xpose.msra.mxu0 0.0
    %2530 = vmatpush.xpose.msra.mxu0 0.0
    %2531 = vmatpush.xpose.msra.mxu0 0.0
    %2532 = vmatpush.xpose.msra.mxu0 %v472
    %2533 = vmatpush.xpose.msra.mxu0 %v376
    %2534 = vmatpush.xpose.msra.mxu0 %v280
    %2535 = vmatpush.xpose.msra.mxu0 %v184
    %2536 = vmatmul.f32.gmra.mxu0 %v618
    %v2537 = vpop.f32.mrf.mxu0
    %v2538 = vadd.f32 %v2518, %v2537
    %2539 = vdwg.mxu0
    %2540 = vmatpush.xpose.msra.mxu0 0.0
    %2541 = vmatpush.xpose.msra.mxu0 0.0
    %2542 = vmatpush.xpose.msra.mxu0 0.0
    %2543 = vmatpush.xpose.msra.mxu0 0.0
    %2544 = vmatpush.xpose.msra.mxu0 0.0
    %2545 = vmatpush.xpose.msra.mxu0 0.0
    %2546 = vmatpush.xpose.msra.mxu0 0.0
    %2547 = vmatpush.xpose.msra.mxu0 0.0
    %2548 = vmatpush.xpose.msra.mxu0 0.0
    %2549 = vmatpush.xpose.msra.mxu0 0.0
    %2550 = vmatpush.xpose.msra.mxu0 0.0
    %2551 = vmatpush.xpose.msra.mxu0 0.0
    %2552 = vmatpush.xpose.msra.mxu0 %v473
    %2553 = vmatpush.xpose.msra.mxu0 %v377
    %2554 = vmatpush.xpose.msra.mxu0 %v281
    %2555 = vmatpush.xpose.msra.mxu0 %v185
    %2556 = vmatmul.f32.gmra.mxu0 %v619
    %v2557 = vpop.f32.mrf.mxu0
    %v2558 = vadd.f32 %v2538, %v2557
    %2559 = vdwg.mxu0
    %2560 = vmatpush.xpose.msra.mxu0 0.0
    %2561 = vmatpush.xpose.msra.mxu0 0.0
    %2562 = vmatpush.xpose.msra.mxu0 0.0
    %2563 = vmatpush.xpose.msra.mxu0 0.0
    %2564 = vmatpush.xpose.msra.mxu0 0.0
    %2565 = vmatpush.xpose.msra.mxu0 0.0
    %2566 = vmatpush.xpose.msra.mxu0 0.0
    %2567 = vmatpush.xpose.msra.mxu0 0.0
    %2568 = vmatpush.xpose.msra.mxu0 0.0
    %2569 = vmatpush.xpose.msra.mxu0 0.0
    %2570 = vmatpush.xpose.msra.mxu0 0.0
    %2571 = vmatpush.xpose.msra.mxu0 0.0
    %2572 = vmatpush.xpose.msra.mxu0 %v474
    %2573 = vmatpush.xpose.msra.mxu0 %v378
    %2574 = vmatpush.xpose.msra.mxu0 %v282
    %2575 = vmatpush.xpose.msra.mxu0 %v186
    %2576 = vmatmul.f32.gmra.mxu0 %v620
    %v2577 = vpop.f32.mrf.mxu0
    %v2578 = vadd.f32 %v2558, %v2577
    %2579 = vdwg.mxu0
    %2580 = vmatpush.xpose.msra.mxu0 0.0
    %2581 = vmatpush.xpose.msra.mxu0 0.0
    %2582 = vmatpush.xpose.msra.mxu0 0.0
    %2583 = vmatpush.xpose.msra.mxu0 0.0
    %2584 = vmatpush.xpose.msra.mxu0 0.0
    %2585 = vmatpush.xpose.msra.mxu0 0.0
    %2586 = vmatpush.xpose.msra.mxu0 0.0
    %2587 = vmatpush.xpose.msra.mxu0 0.0
    %2588 = vmatpush.xpose.msra.mxu0 0.0
    %2589 = vmatpush.xpose.msra.mxu0 0.0
    %2590 = vmatpush.xpose.msra.mxu0 0.0
    %2591 = vmatpush.xpose.msra.mxu0 0.0
    %2592 = vmatpush.xpose.msra.mxu0 %v475
    %2593 = vmatpush.xpose.msra.mxu0 %v379
    %2594 = vmatpush.xpose.msra.mxu0 %v283
    %2595 = vmatpush.xpose.msra.mxu0 %v187
    %2596 = vmatmul.f32.gmra.mxu0 %v621
    %v2597 = vpop.f32.mrf.mxu0
    %v2598 = vadd.f32 %v2578, %v2597
    %2599 = vdwg.mxu0
    %2600 = vmatpush.xpose.msra.mxu0 0.0
    %2601 = vmatpush.xpose.msra.mxu0 0.0
    %2602 = vmatpush.xpose.msra.mxu0 0.0
    %2603 = vmatpush.xpose.msra.mxu0 0.0
    %2604 = vmatpush.xpose.msra.mxu0 0.0
    %2605 = vmatpush.xpose.msra.mxu0 0.0
    %2606 = vmatpush.xpose.msra.mxu0 0.0
    %2607 = vmatpush.xpose.msra.mxu0 0.0
    %2608 = vmatpush.xpose.msra.mxu0 0.0
    %2609 = vmatpush.xpose.msra.mxu0 0.0
    %2610 = vmatpush.xpose.msra.mxu0 0.0
    %2611 = vmatpush.xpose.msra.mxu0 0.0
    %2612 = vmatpush.xpose.msra.mxu0 %v476
    %2613 = vmatpush.xpose.msra.mxu0 %v380
    %2614 = vmatpush.xpose.msra.mxu0 %v284
    %2615 = vmatpush.xpose.msra.mxu0 %v188
    %2616 = vmatmul.f32.gmra.mxu0 %v622
    %v2617 = vpop.f32.mrf.mxu0
    %v2618 = vadd.f32 %v2598, %v2617
    %2619 = vdwg.mxu0
    %2620 = vmatpush.xpose.msra.mxu0 0.0
    %2621 = vmatpush.xpose.msra.mxu0 0.0
    %2622 = vmatpush.xpose.msra.mxu0 0.0
    %2623 = vmatpush.xpose.msra.mxu0 0.0
    %2624 = vmatpush.xpose.msra.mxu0 0.0
    %2625 = vmatpush.xpose.msra.mxu0 0.0
    %2626 = vmatpush.xpose.msra.mxu0 0.0
    %2627 = vmatpush.xpose.msra.mxu0 0.0
    %2628 = vmatpush.xpose.msra.mxu0 0.0
    %2629 = vmatpush.xpose.msra.mxu0 0.0
    %2630 = vmatpush.xpose.msra.mxu0 0.0
    %2631 = vmatpush.xpose.msra.mxu0 0.0
    %2632 = vmatpush.xpose.msra.mxu0 %v477
    %2633 = vmatpush.xpose.msra.mxu0 %v381
    %2634 = vmatpush.xpose.msra.mxu0 %v285
    %2635 = vmatpush.xpose.msra.mxu0 %v189
    %2636 = vmatmul.f32.gmra.mxu0 %v623
    %v2637 = vpop.f32.mrf.mxu0
    %v2638 = vadd.f32 %v2618, %v2637
    %2639 = vdwg.mxu0
    %v2640 = vadd.f32 %v478, %v2638
    %vm2641 = vcmask 238592
    %2642 = vst.msk [vmem:[#allocation2] sm:$0x3] %vm2641, %v2640
    // Predicated region
    $region38: #{mlp_forward.1} parent=1 // pred_check
      %p2643 = pneg %p64
    $region39: #{mlp_forward.1} parent=1 // pred_check_branch
      %2645 = sbr.rel (%p2643) target = $region41
    $region40: #{mlp_forward.1} parent=1 // pred_region
      %v2646 = vld [vmem:[#allocation2] sm:$0x3]
      %v2647 = vld [vmem:[#allocation6] sm:$0x1]
      %v2649 = vperm.slane %v2647, 0
      %v2651 = vadd.f32 %v2646, %v2649
      %v2652 = vmax.f32 %v2651, 0.0
      %v2653 = vld [vmem:[%s3] sm:$0xff]
      %v2654 = vld [vmem:[%s3 + $0x8] sm:$0xff]
      %v2655 = vld [vmem:[%s3 + $0x10] sm:$0xff]
      %v2656 = vld [vmem:[%s3 + $0x18] sm:$0x3f]
      %v2657 = vld [vmem:[#allocation8] sm:$0x1]
      %v2659 = vperm.slane %v2657, 0
      %vm2661 = vcmask 244736
      %v2663 = vsel %vm2661, %v2652, 0
      %vm2665 = vcmask 1045504
      %v2667 = vsel %vm2665, %v2656, 0
      %2669 = vmatpush.msra.mxu0 0.0
      %2670 = vmatpush.msra.mxu0 0.0
      %2671 = vmatpush.msra.mxu0 0.0
      %2672 = vmatpush.msra.mxu0 0.0
      %2673 = vmatpush.msra.mxu0 0.0
      %2674 = vmatpush.msra.mxu0 0.0
      %2675 = vmatpush.msra.mxu0 0.0
      %2676 = vmatpush.msra.mxu0 0.0
      %2677 = vmatpush.msra.mxu0 0.0
      %2678 = vmatpush.msra.mxu0 0.0
      %2679 = vmatpush.msra.mxu0 0.0
      %2680 = vmatpush.msra.mxu0 0.0
      %2681 = vmatpush.msra.mxu0 %v2667
      %2682 = vmatpush.msra.mxu0 %v2655
      %2683 = vmatpush.msra.mxu0 %v2654
      %2684 = vmatpush.msra.mxu0 %v2653
      %2685 = vmatmul.f32.gmra.mxu0 %v2663
      %v2686 = vpop.f32.mrf.mxu0
      %v2687 = vadd.f32 %v2659, %v2686
      %2688 = vdwg.mxu0
      %vm2689 = vcmask 41984
      %2690 = vst.msk [vmem:[#allocation9] sm:$0x3] %vm2689, %v2687
    $region41: #{mlp_forward.1} parent=1 // pred_fallthru
      _
    // Predicated region
    $region42: #{mlp_forward.1} parent=1 // pred_check
      _
    $region43: #{mlp_forward.1} parent=1 // pred_check_branch
      %2692 = sbr.rel (0) target = $region45
    $region44: #{mlp_forward.1} parent=1 // pred_region
      %2694 = vsyncadd [#allocation5], 0
      %s2696 = sshll.u32 [#allocation9], 4
      %s2697 = int_to_ptr.vmem [resolvable:$true] %s2696
      %s2698 = sshll.u32 %s5, 4
      %s2699 = int_to_ptr.hbm [resolvable:$true] %s2698
      %2701 = dma.vmem_to_hbm [thread:$0]  %s2697, 32, %s2699, [#allocation5]
    $region45: #{mlp_forward.1} parent=1 // pred_fallthru
      _
    // Predicated region
    $region46: #{mlp_forward.1} parent=1 // pred_check
      _
    $region47: #{mlp_forward.1} parent=1 // pred_check_branch
      %2703 = sbr.rel (0) target = $region49
    $region48: #{mlp_forward.1} parent=1 // pred_region
      %2705 = dma.done [#allocation5], 32
    $region49: #{mlp_forward.1} parent=1 // pred_fallthru
      _
    %2706 = vsyncpa [#allocation4], 1
    %2707 = vsyncpa [#allocation7], 1
    %2708 = vsyncpa [#allocation5], 1

</llo_original>
